<compile_context>
chip_gen: v6e
topology: v6e:2x2x1
jax: 0.10.0
libtpu: 0.0.40
codegen_flags: <defaults>
</compile_context>

<pallas_src>
import jax
import jax.numpy as jnp
from jax.experimental import pallas as pl
from jax.experimental.pallas import tpu as pltpu


def lstm_tagger_kernel(ids_ref,
                       emb_tab_ref, h0_ref, c0_ref,
                       w_ih_ref, w_hh_ref, b_ref,
                       w_out_ref, b_out_ref,
                       out_ref,
                       ptab_sc, xp_sc, hall_sc):
    """Whole LSTM tagger in one invocation.

    ids_ref:   (S*B,)    int32 token ids in SMEM (scalar prefetch), seq-major
    emb_tab_ref:(V, E)   embedding table
    h0/c0:     (B, H)    initial states
    w_ih_ref:  (E, 4H)   input->gates  (gate order i,f,g,o), pre-transposed
    w_hh_ref:  (H, 4H)   hidden->gates, pre-transposed
    b_ref:     (1, 4H)   b_ih + b_hh
    w_out_ref: (H, TP)   Linear weight, zero-padded to TP (multiple of 128)
    b_out_ref: (1, TP)   Linear bias, zero-padded
    out_ref:   (S*B, TP) logits slab (single lane-dense store)
    ptab_sc:   (V, 4H)   VMEM scratch: projected embedding table
    xp_sc:     (S*B, 4H) VMEM scratch: gathered, projected inputs per step
    hall_sc:   (S*B, H)  VMEM scratch: every h_t, consumed by the final matmul
    """
    B, H = h0_ref.shape
    SB = xp_sc.shape[0]
    S = SB // B

    # (0) Project the whole embedding table once (V rows <= S*B rows):
    #     xp[t] = emb_table[tok_t] @ W_ih + b == (emb_table @ W_ih + b)[tok_t]
    ptab_sc[...] = (jnp.dot(emb_tab_ref[...], w_ih_ref[...],
                            preferred_element_type=jnp.float32) + b_ref[...])

    # (1) Fused embedding gather: SMEM scalar ids index lane-dense (1, 4H) rows.
    @pl.loop(0, SB)
    def _(r):
        tok = ids_ref[r]
        xp_sc[pl.ds(r, 1), :] = ptab_sc[pl.ds(tok, 1), :]

    w_hh = w_hh_ref[...]  # resident; only per-step matmul is h @ W_hh

    def step(t, carry):
        h_prev, c_prev = carry
        row = pl.multiple_of(t * B, B)  # sublane-aligned slab offset
        gates = (xp_sc[pl.ds(row, B), :]
                 + jnp.dot(h_prev, w_hh, preferred_element_type=jnp.float32))
        # Full 4H-wide activations: at H=32 all gates live in one vreg and the
        # EUP has its own VLIW slot; per-gate lane slices are static.
        sig = jax.nn.sigmoid(gates)
        tnh = jnp.tanh(gates)
        i_g = sig[:, 0 * H:1 * H]
        f_g = sig[:, 1 * H:2 * H]
        g_g = tnh[:, 2 * H:3 * H]
        o_g = sig[:, 3 * H:4 * H]
        c_new = f_g * c_prev + i_g * g_g
        h_new = o_g * jnp.tanh(c_new)
        hall_sc[pl.ds(row, B), :] = h_new
        return (h_new, c_new)

    jax.lax.fori_loop(0, S, step, (h0_ref[...], c0_ref[...]), unroll=True)

    # (2) Deferred output Linear: one (S*B, H) x (H, TP) MXU call and one
    #     lane-dense (128-wide) store for all logits.
    out_ref[...] = (jnp.dot(hall_sc[...], w_out_ref[...],
                            preferred_element_type=jnp.float32) + b_out_ref[...])


def tagging_forward(x_tokens, params, h0, c0):
    """Forward pass of TaggingModel.

    x_tokens: (S, B) int32 token ids. Returns logits (S, B, T) float32.
    """
    S, B = x_tokens.shape
    V, E = params["emb_table"].shape
    H = params["w_hh_t"].shape[0]
    T = params["w_out_t"].shape[1]
    TP = params["w_out_p"].shape[1]
    SB = S * B

    ids = x_tokens.reshape(SB).astype(jnp.int32)   # seq-major rows, matches kernel

    grid_spec = pltpu.PrefetchScalarGridSpec(
        num_scalar_prefetch=1,
        grid=(1,),
        in_specs=[
            pl.BlockSpec((V, E), lambda i, ids_sm: (0, 0)),        # emb_table
            pl.BlockSpec((B, H), lambda i, ids_sm: (0, 0)),        # h0
            pl.BlockSpec((B, H), lambda i, ids_sm: (0, 0)),        # c0
            pl.BlockSpec((E, 4 * H), lambda i, ids_sm: (0, 0)),    # w_ih_t
            pl.BlockSpec((H, 4 * H), lambda i, ids_sm: (0, 0)),    # w_hh_t
            pl.BlockSpec((1, 4 * H), lambda i, ids_sm: (0, 0)),    # b (ih + hh)
            pl.BlockSpec((H, TP), lambda i, ids_sm: (0, 0)),       # w_out_p (padded)
            pl.BlockSpec((1, TP), lambda i, ids_sm: (0, 0)),       # b_out_p (padded)
        ],
        out_specs=pl.BlockSpec((SB, TP), lambda i, ids_sm: (0, 0)),
        scratch_shapes=[
            pltpu.VMEM((V, 4 * H), jnp.float32),    # projected embedding table
            pltpu.VMEM((SB, 4 * H), jnp.float32),   # gathered input projections
            pltpu.VMEM((SB, H), jnp.float32),       # all h_t
        ],
    )

    out_p = pl.pallas_call(
        lstm_tagger_kernel,
        out_shape=jax.ShapeDtypeStruct((SB, TP), jnp.float32),
        grid_spec=grid_spec,
        compiler_params=pltpu.CompilerParams(
            dimension_semantics=("arbitrary",)),
    )(ids, params["emb_table"], h0, c0,
      params["w_ih_t"], params["w_hh_t"], params["b_gates"],
      params["w_out_p"], params["b_out_p"])

    return out_p[:, :T].reshape(S, B, T)


def reference_forward(x_tokens, params, h0, c0):
    """Pure-JAX reference (same math) to validate the kernel."""
    emb = params["emb_table"][x_tokens]            # (S, B, E)
    H = params["w_hh_t"].shape[0]

    def step(carry, x_t):
        h, c = carry
        gates = x_t @ params["w_ih_t"] + h @ params["w_hh_t"] + params["b_gates"]
        i_g = jax.nn.sigmoid(gates[:, 0 * H:1 * H])
        f_g = jax.nn.sigmoid(gates[:, 1 * H:2 * H])
        g_g = jnp.tanh(gates[:, 2 * H:3 * H])
        o_g = jax.nn.sigmoid(gates[:, 3 * H:4 * H])
        c_new = f_g * c + i_g * g_g
        h_new = o_g * jnp.tanh(c_new)
        y = h_new @ params["w_out_t"] + params["b_out"]
        return (h_new, c_new), y

    (_, _), ys = jax.lax.scan(step, (h0, c0), emb)
    return ys


def make_params(key, vocab_size, emb_size, h_size, tag_size):
    ks = jax.random.split(key, 7)
    scale = 0.1
    emb_table = scale * jax.random.normal(ks[0], (vocab_size, emb_size), jnp.float32)
    emb_table = emb_table.at[0].set(0.0)   # padding_idx=0 -> zero row
    # PyTorch LSTM weights: weight_ih (4H, E), weight_hh (4H, H); gate order i,f,g,o.
    w_ih = scale * jax.random.normal(ks[1], (4 * h_size, emb_size), jnp.float32)
    w_hh = scale * jax.random.normal(ks[2], (4 * h_size, h_size), jnp.float32)
    b_ih = scale * jax.random.normal(ks[3], (4 * h_size,), jnp.float32)
    b_hh = scale * jax.random.normal(ks[4], (4 * h_size,), jnp.float32)
    w_out = scale * jax.random.normal(ks[5], (tag_size, h_size), jnp.float32)
    b_out = scale * jax.random.normal(ks[6], (tag_size,), jnp.float32)

    # Lane-dense padded Linear weights, built ONCE here (not per forward call).
    tag_pad = ((tag_size + 127) // 128) * 128
    w_out_t = w_out.T                               # (H, T)
    b_out_row = b_out.reshape(1, -1)                # (1, T)
    w_out_p = jnp.zeros((h_size, tag_pad), jnp.float32).at[:, :tag_size].set(w_out_t)
    b_out_p = jnp.zeros((1, tag_pad), jnp.float32).at[:, :tag_size].set(b_out_row)

    return {
        "emb_table": emb_table,
        "w_ih_t": w_ih.T,                            # (E, 4H)
        "w_hh_t": w_hh.T,                            # (H, 4H)
        "b_gates": (b_ih + b_hh).reshape(1, -1),     # (1, 4H)
        "w_out_t": w_out_t,                          # (H, T)   (reference)
        "b_out": b_out_row,                          # (1, T)   (reference)
        "w_out_p": w_out_p,                          # (H, TP)  (kernel)
        "b_out_p": b_out_p,                          # (1, TP)  (kernel)
    }


if __name__ == "__main__":
    vocab_size, emb_size, h_size, tag_size = 20, 32, 32, 8
    seq_len, batch = 8, 8

    key = jax.random.PRNGKey(0)
    k_tok, k_par, k_h0, k_c0 = jax.random.split(key, 4)

    # x: (seq, batch) token ids, PyTorch LSTM seq-first convention.
    x_tokens = jax.random.randint(k_tok, (seq_len, batch), 0, vocab_size, jnp.int32)
    params = make_params(k_par, vocab_size, emb_size, h_size, tag_size)

    # The PyTorch forward draws h0/c0 = torch.randn(1, B, H); here drawn
    # deterministically from the JAX key (shape squeezed to (B, H)).
    h0 = jax.random.normal(k_h0, (batch, h_size), jnp.float32)
    c0 = jax.random.normal(k_c0, (batch, h_size), jnp.float32)

    out = tagging_forward(x_tokens, params, h0, c0)
    out = jax.block_until_ready(out)

    ref = reference_forward(x_tokens, params, h0, c0)
    assert out.shape == (seq_len, batch, tag_size)
    assert jnp.allclose(out, ref, atol=1e-5, rtol=1e-5)

    print("KERNEL_OK")
</pallas_src>

<mosaic_0001>
module attributes {stable_mosaic.version = 11 : i64} {
  func.func @lstm_tagger_kernel(%arg0: i32, %arg1: memref<64xi32, #tpu.memory_space<smem>>, %arg2: memref<20x32xf32, #tpu.memory_space<vmem>>, %arg3: memref<8x32xf32, #tpu.memory_space<vmem>>, %arg4: memref<8x32xf32, #tpu.memory_space<vmem>>, %arg5: memref<32x128xf32, #tpu.memory_space<vmem>>, %arg6: memref<32x128xf32, #tpu.memory_space<vmem>>, %arg7: memref<1x128xf32, #tpu.memory_space<vmem>>, %arg8: memref<32x128xf32, #tpu.memory_space<vmem>>, %arg9: memref<1x128xf32, #tpu.memory_space<vmem>>, %arg10: memref<64x128xf32, #tpu.memory_space<vmem>>, %arg11: memref<20x128xf32, #tpu.memory_space<vmem>>, %arg12: memref<64x128xf32, #tpu.memory_space<vmem>>, %arg13: memref<64x32xf32, #tpu.memory_space<vmem>>) attributes {dimension_semantics = [#tpu.dimension_semantics<arbitrary>], iteration_bounds = array<i64: 1>, scalar_prefetch = 1 : i64, scratch_operands = 3 : i64, tpu.core_type = #tpu.core_type<tc>, window_params = [{pipeline_mode = #tpu.pipeline_mode<synchronous>, transform_indices = @transform_0, window_bounds = array<i64: 20, 32>}, {pipeline_mode = #tpu.pipeline_mode<synchronous>, transform_indices = @transform_1, window_bounds = array<i64: 8, 32>}, {pipeline_mode = #tpu.pipeline_mode<synchronous>, transform_indices = @transform_2, window_bounds = array<i64: 8, 32>}, {pipeline_mode = #tpu.pipeline_mode<synchronous>, transform_indices = @transform_3, window_bounds = array<i64: 32, 128>}, {pipeline_mode = #tpu.pipeline_mode<synchronous>, transform_indices = @transform_4, window_bounds = array<i64: 32, 128>}, {pipeline_mode = #tpu.pipeline_mode<synchronous>, transform_indices = @transform_5, window_bounds = array<i64: 1, 128>}, {pipeline_mode = #tpu.pipeline_mode<synchronous>, transform_indices = @transform_6, window_bounds = array<i64: 32, 128>}, {pipeline_mode = #tpu.pipeline_mode<synchronous>, transform_indices = @transform_7, window_bounds = array<i64: 1, 128>}, {pipeline_mode = #tpu.pipeline_mode<synchronous>, transform_indices = @transform_8, window_bounds = array<i64: 64, 128>}]} {
    %c0 = arith.constant 0 : index
    %c0_0 = arith.constant 0 : index
    %0 = vector.load %arg2[%c0, %c0_0] : memref<20x32xf32, #tpu.memory_space<vmem>>, vector<20x32xf32>
    %c0_1 = arith.constant 0 : index
    %c0_2 = arith.constant 0 : index
    %1 = vector.load %arg5[%c0_1, %c0_2] : memref<32x128xf32, #tpu.memory_space<vmem>>, vector<32x128xf32>
    %cst = arith.constant dense<0.000000e+00> : vector<20x128xf32>
    %2 = tpu.matmul %0, %1, %cst {dimension_numbers = #tpu.dot_dimension_numbers<[1], [0], [0], [1], [0, 0, 1, 1], [], []>} : vector<20x32xf32>, vector<32x128xf32>, vector<20x128xf32> -> vector<20x128xf32>
    %c0_3 = arith.constant 0 : index
    %c0_4 = arith.constant 0 : index
    %3 = vector.load %arg7[%c0_3, %c0_4] : memref<1x128xf32, #tpu.memory_space<vmem>>, vector<1x128xf32>
    %4 = vector.broadcast %3 : vector<1x128xf32> to vector<20x128xf32>
    %5 = arith.addf %2, %4 : vector<20x128xf32>
    %c0_5 = arith.constant 0 : index
    %c0_6 = arith.constant 0 : index
    %6 = vector.load %arg11[%c0_5, %c0_6] : memref<20x128xf32, #tpu.memory_space<vmem>>, vector<20x128xf32>
    tpu.vector_store %arg11[%c0_5, %c0_6], %5 {strides = array<i32>} : memref<20x128xf32, #tpu.memory_space<vmem>>, vector<20x128xf32>,
    %c0_i32 = arith.constant 0 : i32
    %c64_i32 = arith.constant 64 : i32
    %7 = arith.addi %c0_i32, %c64_i32 : i32
    %c1_i32 = arith.constant 1 : i32
    scf.for %arg14 = %c0_i32 to %7 step %c1_i32  : i32 {
      %c1_i32_65 = arith.constant 1 : i32
      %202 = arith.muli %arg14, %c1_i32_65 : i32
      %c0_i32_66 = arith.constant 0 : i32
      %203 = arith.addi %c0_i32_66, %202 : i32
      %204 = arith.index_cast %203 : i32 to index
      %205 = memref.load %arg1[%204] : memref<64xi32, #tpu.memory_space<smem>>
      %206 = arith.index_cast %205 : i32 to index
      %c0_67 = arith.constant 0 : index
      %207 = vector.load %arg11[%206, %c0_67] : memref<20x128xf32, #tpu.memory_space<vmem>>, vector<1x128xf32>
      %208 = arith.index_cast %203 : i32 to index
      %c0_68 = arith.constant 0 : index
      %209 = vector.load %arg12[%208, %c0_68] : memref<64x128xf32, #tpu.memory_space<vmem>>, vector<1x128xf32>
      tpu.vector_store %arg12[%208, %c0_68], %207 {strides = array<i32>} : memref<64x128xf32, #tpu.memory_space<vmem>>, vector<1x128xf32>,
    }
    %c64_i32_7 = arith.constant 64 : i32
    %c0_8 = arith.constant 0 : index
    %c0_9 = arith.constant 0 : index
    %8 = vector.load %arg6[%c0_8, %c0_9] : memref<32x128xf32, #tpu.memory_space<vmem>>, vector<32x128xf32>
    %c0_10 = arith.constant 0 : index
    %c0_11 = arith.constant 0 : index
    %9 = vector.load %arg3[%c0_10, %c0_11] : memref<8x32xf32, #tpu.memory_space<vmem>>, vector<8x32xf32>
    %c0_12 = arith.constant 0 : index
    %c0_13 = arith.constant 0 : index
    %10 = vector.load %arg4[%c0_12, %c0_13] : memref<8x32xf32, #tpu.memory_space<vmem>>, vector<8x32xf32>
    %c0_i32_14 = arith.constant 0 : i32
    %c8_i32 = arith.constant 8 : i32
    %11 = arith.muli %c0_i32_14, %c8_i32 : i32
    %12 = tpu.assume_multiple %11, 8 : i32
    %13 = arith.index_cast %12 : i32 to index
    %c0_15 = arith.constant 0 : index
    %14 = vector.load %arg12[%13, %c0_15] : memref<64x128xf32, #tpu.memory_space<vmem>>, vector<8x128xf32>
    %cst_16 = arith.constant dense<0.000000e+00> : vector<8x128xf32>
    %15 = tpu.matmul %9, %8, %cst_16 {dimension_numbers = #tpu.dot_dimension_numbers<[1], [0], [0], [1], [0, 0, 1, 1], [], []>} : vector<8x32xf32>, vector<32x128xf32>, vector<8x128xf32> -> vector<8x128xf32>
    %16 = arith.addf %14, %15 : vector<8x128xf32>
    %17 = arith.negf %16 : vector<8x128xf32>
    %18 = math.exp %17 : vector<8x128xf32>
    %cst_17 = arith.constant 1.000000e+00 : f32
    %19 = vector.broadcast %cst_17 : f32 to vector<8x128xf32>
    %20 = arith.addf %19, %18 : vector<8x128xf32>
    %21 = arith.divf %19, %20 : vector<8x128xf32>
    %22 = math.tanh %16 : vector<8x128xf32>
    %23 = vector.extract_strided_slice %21 {offsets = [0, 0], sizes = [8, 32], strides = [1, 1]} : vector<8x128xf32> to vector<8x32xf32>
    %24 = vector.extract_strided_slice %21 {offsets = [0, 32], sizes = [8, 32], strides = [1, 1]} : vector<8x128xf32> to vector<8x32xf32>
    %25 = vector.extract_strided_slice %22 {offsets = [0, 64], sizes = [8, 32], strides = [1, 1]} : vector<8x128xf32> to vector<8x32xf32>
    %26 = vector.extract_strided_slice %21 {offsets = [0, 96], sizes = [8, 32], strides = [1, 1]} : vector<8x128xf32> to vector<8x32xf32>
    %27 = arith.mulf %24, %10 : vector<8x32xf32>
    %28 = arith.mulf %23, %25 : vector<8x32xf32>
    %29 = arith.addf %27, %28 : vector<8x32xf32>
    %30 = math.tanh %29 : vector<8x32xf32>
    %31 = arith.mulf %26, %30 : vector<8x32xf32>
    %32 = arith.index_cast %12 : i32 to index
    %c0_18 = arith.constant 0 : index
    %33 = vector.load %arg13[%32, %c0_18] : memref<64x32xf32, #tpu.memory_space<vmem>>, vector<8x32xf32>
    tpu.vector_store %arg13[%32, %c0_18], %31 {strides = array<i32>} : memref<64x32xf32, #tpu.memory_space<vmem>>, vector<8x32xf32>,
    %c1_i32_19 = arith.constant 1 : i32
    %c8_i32_20 = arith.constant 8 : i32
    %34 = arith.muli %c1_i32_19, %c8_i32_20 : i32
    %35 = tpu.assume_multiple %34, 8 : i32
    %36 = arith.index_cast %35 : i32 to index
    %c0_21 = arith.constant 0 : index
    %37 = vector.load %arg12[%36, %c0_21] : memref<64x128xf32, #tpu.memory_space<vmem>>, vector<8x128xf32>
    %cst_22 = arith.constant dense<0.000000e+00> : vector<8x128xf32>
    %38 = tpu.matmul %31, %8, %cst_22 {dimension_numbers = #tpu.dot_dimension_numbers<[1], [0], [0], [1], [0, 0, 1, 1], [], []>} : vector<8x32xf32>, vector<32x128xf32>, vector<8x128xf32> -> vector<8x128xf32>
    %39 = arith.addf %37, %38 : vector<8x128xf32>
    %40 = arith.negf %39 : vector<8x128xf32>
    %41 = math.exp %40 : vector<8x128xf32>
    %cst_23 = arith.constant 1.000000e+00 : f32
    %42 = vector.broadcast %cst_23 : f32 to vector<8x128xf32>
    %43 = arith.addf %42, %41 : vector<8x128xf32>
    %44 = arith.divf %42, %43 : vector<8x128xf32>
    %45 = math.tanh %39 : vector<8x128xf32>
    %46 = vector.extract_strided_slice %44 {offsets = [0, 0], sizes = [8, 32], strides = [1, 1]} : vector<8x128xf32> to vector<8x32xf32>
    %47 = vector.extract_strided_slice %44 {offsets = [0, 32], sizes = [8, 32], strides = [1, 1]} : vector<8x128xf32> to vector<8x32xf32>
    %48 = vector.extract_strided_slice %45 {offsets = [0, 64], sizes = [8, 32], strides = [1, 1]} : vector<8x128xf32> to vector<8x32xf32>
    %49 = vector.extract_strided_slice %44 {offsets = [0, 96], sizes = [8, 32], strides = [1, 1]} : vector<8x128xf32> to vector<8x32xf32>
    %50 = arith.mulf %47, %29 : vector<8x32xf32>
    %51 = arith.mulf %46, %48 : vector<8x32xf32>
    %52 = arith.addf %50, %51 : vector<8x32xf32>
    %53 = math.tanh %52 : vector<8x32xf32>
    %54 = arith.mulf %49, %53 : vector<8x32xf32>
    %55 = arith.index_cast %35 : i32 to index
    %c0_24 = arith.constant 0 : index
    %56 = vector.load %arg13[%55, %c0_24] : memref<64x32xf32, #tpu.memory_space<vmem>>, vector<8x32xf32>
    tpu.vector_store %arg13[%55, %c0_24], %54 {strides = array<i32>} : memref<64x32xf32, #tpu.memory_space<vmem>>, vector<8x32xf32>,
    %c2_i32 = arith.constant 2 : i32
    %c8_i32_25 = arith.constant 8 : i32
    %57 = arith.muli %c2_i32, %c8_i32_25 : i32
    %58 = tpu.assume_multiple %57, 8 : i32
    %59 = arith.index_cast %58 : i32 to index
    %c0_26 = arith.constant 0 : index
    %60 = vector.load %arg12[%59, %c0_26] : memref<64x128xf32, #tpu.memory_space<vmem>>, vector<8x128xf32>
    %cst_27 = arith.constant dense<0.000000e+00> : vector<8x128xf32>
    %61 = tpu.matmul %54, %8, %cst_27 {dimension_numbers = #tpu.dot_dimension_numbers<[1], [0], [0], [1], [0, 0, 1, 1], [], []>} : vector<8x32xf32>, vector<32x128xf32>, vector<8x128xf32> -> vector<8x128xf32>
    %62 = arith.addf %60, %61 : vector<8x128xf32>
    %63 = arith.negf %62 : vector<8x128xf32>
    %64 = math.exp %63 : vector<8x128xf32>
    %cst_28 = arith.constant 1.000000e+00 : f32
    %65 = vector.broadcast %cst_28 : f32 to vector<8x128xf32>
    %66 = arith.addf %65, %64 : vector<8x128xf32>
    %67 = arith.divf %65, %66 : vector<8x128xf32>
    %68 = math.tanh %62 : vector<8x128xf32>
    %69 = vector.extract_strided_slice %67 {offsets = [0, 0], sizes = [8, 32], strides = [1, 1]} : vector<8x128xf32> to vector<8x32xf32>
    %70 = vector.extract_strided_slice %67 {offsets = [0, 32], sizes = [8, 32], strides = [1, 1]} : vector<8x128xf32> to vector<8x32xf32>
    %71 = vector.extract_strided_slice %68 {offsets = [0, 64], sizes = [8, 32], strides = [1, 1]} : vector<8x128xf32> to vector<8x32xf32>
    %72 = vector.extract_strided_slice %67 {offsets = [0, 96], sizes = [8, 32], strides = [1, 1]} : vector<8x128xf32> to vector<8x32xf32>
    %73 = arith.mulf %70, %52 : vector<8x32xf32>
    %74 = arith.mulf %69, %71 : vector<8x32xf32>
    %75 = arith.addf %73, %74 : vector<8x32xf32>
    %76 = math.tanh %75 : vector<8x32xf32>
    %77 = arith.mulf %72, %76 : vector<8x32xf32>
    %78 = arith.index_cast %58 : i32 to index
    %c0_29 = arith.constant 0 : index
    %79 = vector.load %arg13[%78, %c0_29] : memref<64x32xf32, #tpu.memory_space<vmem>>, vector<8x32xf32>
    tpu.vector_store %arg13[%78, %c0_29], %77 {strides = array<i32>} : memref<64x32xf32, #tpu.memory_space<vmem>>, vector<8x32xf32>,
    %c3_i32 = arith.constant 3 : i32
    %c8_i32_30 = arith.constant 8 : i32
    %80 = arith.muli %c3_i32, %c8_i32_30 : i32
    %81 = tpu.assume_multiple %80, 8 : i32
    %82 = arith.index_cast %81 : i32 to index
    %c0_31 = arith.constant 0 : index
    %83 = vector.load %arg12[%82, %c0_31] : memref<64x128xf32, #tpu.memory_space<vmem>>, vector<8x128xf32>
    %cst_32 = arith.constant dense<0.000000e+00> : vector<8x128xf32>
    %84 = tpu.matmul %77, %8, %cst_32 {dimension_numbers = #tpu.dot_dimension_numbers<[1], [0], [0], [1], [0, 0, 1, 1], [], []>} : vector<8x32xf32>, vector<32x128xf32>, vector<8x128xf32> -> vector<8x128xf32>
    %85 = arith.addf %83, %84 : vector<8x128xf32>
    %86 = arith.negf %85 : vector<8x128xf32>
    %87 = math.exp %86 : vector<8x128xf32>
    %cst_33 = arith.constant 1.000000e+00 : f32
    %88 = vector.broadcast %cst_33 : f32 to vector<8x128xf32>
    %89 = arith.addf %88, %87 : vector<8x128xf32>
    %90 = arith.divf %88, %89 : vector<8x128xf32>
    %91 = math.tanh %85 : vector<8x128xf32>
    %92 = vector.extract_strided_slice %90 {offsets = [0, 0], sizes = [8, 32], strides = [1, 1]} : vector<8x128xf32> to vector<8x32xf32>
    %93 = vector.extract_strided_slice %90 {offsets = [0, 32], sizes = [8, 32], strides = [1, 1]} : vector<8x128xf32> to vector<8x32xf32>
    %94 = vector.extract_strided_slice %91 {offsets = [0, 64], sizes = [8, 32], strides = [1, 1]} : vector<8x128xf32> to vector<8x32xf32>
    %95 = vector.extract_strided_slice %90 {offsets = [0, 96], sizes = [8, 32], strides = [1, 1]} : vector<8x128xf32> to vector<8x32xf32>
    %96 = arith.mulf %93, %75 : vector<8x32xf32>
    %97 = arith.mulf %92, %94 : vector<8x32xf32>
    %98 = arith.addf %96, %97 : vector<8x32xf32>
    %99 = math.tanh %98 : vector<8x32xf32>
    %100 = arith.mulf %95, %99 : vector<8x32xf32>
    %101 = arith.index_cast %81 : i32 to index
    %c0_34 = arith.constant 0 : index
    %102 = vector.load %arg13[%101, %c0_34] : memref<64x32xf32, #tpu.memory_space<vmem>>, vector<8x32xf32>
    tpu.vector_store %arg13[%101, %c0_34], %100 {strides = array<i32>} : memref<64x32xf32, #tpu.memory_space<vmem>>, vector<8x32xf32>,
    %c4_i32 = arith.constant 4 : i32
    %c8_i32_35 = arith.constant 8 : i32
    %103 = arith.muli %c4_i32, %c8_i32_35 : i32
    %104 = tpu.assume_multiple %103, 8 : i32
    %105 = arith.index_cast %104 : i32 to index
    %c0_36 = arith.constant 0 : index
    %106 = vector.load %arg12[%105, %c0_36] : memref<64x128xf32, #tpu.memory_space<vmem>>, vector<8x128xf32>
    %cst_37 = arith.constant dense<0.000000e+00> : vector<8x128xf32>
    %107 = tpu.matmul %100, %8, %cst_37 {dimension_numbers = #tpu.dot_dimension_numbers<[1], [0], [0], [1], [0, 0, 1, 1], [], []>} : vector<8x32xf32>, vector<32x128xf32>, vector<8x128xf32> -> vector<8x128xf32>
    %108 = arith.addf %106, %107 : vector<8x128xf32>
    %109 = arith.negf %108 : vector<8x128xf32>
    %110 = math.exp %109 : vector<8x128xf32>
    %cst_38 = arith.constant 1.000000e+00 : f32
    %111 = vector.broadcast %cst_38 : f32 to vector<8x128xf32>
    %112 = arith.addf %111, %110 : vector<8x128xf32>
    %113 = arith.divf %111, %112 : vector<8x128xf32>
    %114 = math.tanh %108 : vector<8x128xf32>
    %115 = vector.extract_strided_slice %113 {offsets = [0, 0], sizes = [8, 32], strides = [1, 1]} : vector<8x128xf32> to vector<8x32xf32>
    %116 = vector.extract_strided_slice %113 {offsets = [0, 32], sizes = [8, 32], strides = [1, 1]} : vector<8x128xf32> to vector<8x32xf32>
    %117 = vector.extract_strided_slice %114 {offsets = [0, 64], sizes = [8, 32], strides = [1, 1]} : vector<8x128xf32> to vector<8x32xf32>
    %118 = vector.extract_strided_slice %113 {offsets = [0, 96], sizes = [8, 32], strides = [1, 1]} : vector<8x128xf32> to vector<8x32xf32>
    %119 = arith.mulf %116, %98 : vector<8x32xf32>
    %120 = arith.mulf %115, %117 : vector<8x32xf32>
    %121 = arith.addf %119, %120 : vector<8x32xf32>
    %122 = math.tanh %121 : vector<8x32xf32>
    %123 = arith.mulf %118, %122 : vector<8x32xf32>
    %124 = arith.index_cast %104 : i32 to index
    %c0_39 = arith.constant 0 : index
    %125 = vector.load %arg13[%124, %c0_39] : memref<64x32xf32, #tpu.memory_space<vmem>>, vector<8x32xf32>
    tpu.vector_store %arg13[%124, %c0_39], %123 {strides = array<i32>} : memref<64x32xf32, #tpu.memory_space<vmem>>, vector<8x32xf32>,
    %c5_i32 = arith.constant 5 : i32
    %c8_i32_40 = arith.constant 8 : i32
    %126 = arith.muli %c5_i32, %c8_i32_40 : i32
    %127 = tpu.assume_multiple %126, 8 : i32
    %128 = arith.index_cast %127 : i32 to index
    %c0_41 = arith.constant 0 : index
    %129 = vector.load %arg12[%128, %c0_41] : memref<64x128xf32, #tpu.memory_space<vmem>>, vector<8x128xf32>
    %cst_42 = arith.constant dense<0.000000e+00> : vector<8x128xf32>
    %130 = tpu.matmul %123, %8, %cst_42 {dimension_numbers = #tpu.dot_dimension_numbers<[1], [0], [0], [1], [0, 0, 1, 1], [], []>} : vector<8x32xf32>, vector<32x128xf32>, vector<8x128xf32> -> vector<8x128xf32>
    %131 = arith.addf %129, %130 : vector<8x128xf32>
    %132 = arith.negf %131 : vector<8x128xf32>
    %133 = math.exp %132 : vector<8x128xf32>
    %cst_43 = arith.constant 1.000000e+00 : f32
    %134 = vector.broadcast %cst_43 : f32 to vector<8x128xf32>
    %135 = arith.addf %134, %133 : vector<8x128xf32>
    %136 = arith.divf %134, %135 : vector<8x128xf32>
    %137 = math.tanh %131 : vector<8x128xf32>
    %138 = vector.extract_strided_slice %136 {offsets = [0, 0], sizes = [8, 32], strides = [1, 1]} : vector<8x128xf32> to vector<8x32xf32>
    %139 = vector.extract_strided_slice %136 {offsets = [0, 32], sizes = [8, 32], strides = [1, 1]} : vector<8x128xf32> to vector<8x32xf32>
    %140 = vector.extract_strided_slice %137 {offsets = [0, 64], sizes = [8, 32], strides = [1, 1]} : vector<8x128xf32> to vector<8x32xf32>
    %141 = vector.extract_strided_slice %136 {offsets = [0, 96], sizes = [8, 32], strides = [1, 1]} : vector<8x128xf32> to vector<8x32xf32>
    %142 = arith.mulf %139, %121 : vector<8x32xf32>
    %143 = arith.mulf %138, %140 : vector<8x32xf32>
    %144 = arith.addf %142, %143 : vector<8x32xf32>
    %145 = math.tanh %144 : vector<8x32xf32>
    %146 = arith.mulf %141, %145 : vector<8x32xf32>
    %147 = arith.index_cast %127 : i32 to index
    %c0_44 = arith.constant 0 : index
    %148 = vector.load %arg13[%147, %c0_44] : memref<64x32xf32, #tpu.memory_space<vmem>>, vector<8x32xf32>
    tpu.vector_store %arg13[%147, %c0_44], %146 {strides = array<i32>} : memref<64x32xf32, #tpu.memory_space<vmem>>, vector<8x32xf32>,
    %c6_i32 = arith.constant 6 : i32
    %c8_i32_45 = arith.constant 8 : i32
    %149 = arith.muli %c6_i32, %c8_i32_45 : i32
    %150 = tpu.assume_multiple %149, 8 : i32
    %151 = arith.index_cast %150 : i32 to index
    %c0_46 = arith.constant 0 : index
    %152 = vector.load %arg12[%151, %c0_46] : memref<64x128xf32, #tpu.memory_space<vmem>>, vector<8x128xf32>
    %cst_47 = arith.constant dense<0.000000e+00> : vector<8x128xf32>
    %153 = tpu.matmul %146, %8, %cst_47 {dimension_numbers = #tpu.dot_dimension_numbers<[1], [0], [0], [1], [0, 0, 1, 1], [], []>} : vector<8x32xf32>, vector<32x128xf32>, vector<8x128xf32> -> vector<8x128xf32>
    %154 = arith.addf %152, %153 : vector<8x128xf32>
    %155 = arith.negf %154 : vector<8x128xf32>
    %156 = math.exp %155 : vector<8x128xf32>
    %cst_48 = arith.constant 1.000000e+00 : f32
    %157 = vector.broadcast %cst_48 : f32 to vector<8x128xf32>
    %158 = arith.addf %157, %156 : vector<8x128xf32>
    %159 = arith.divf %157, %158 : vector<8x128xf32>
    %160 = math.tanh %154 : vector<8x128xf32>
    %161 = vector.extract_strided_slice %159 {offsets = [0, 0], sizes = [8, 32], strides = [1, 1]} : vector<8x128xf32> to vector<8x32xf32>
    %162 = vector.extract_strided_slice %159 {offsets = [0, 32], sizes = [8, 32], strides = [1, 1]} : vector<8x128xf32> to vector<8x32xf32>
    %163 = vector.extract_strided_slice %160 {offsets = [0, 64], sizes = [8, 32], strides = [1, 1]} : vector<8x128xf32> to vector<8x32xf32>
    %164 = vector.extract_strided_slice %159 {offsets = [0, 96], sizes = [8, 32], strides = [1, 1]} : vector<8x128xf32> to vector<8x32xf32>
    %165 = arith.mulf %162, %144 : vector<8x32xf32>
    %166 = arith.mulf %161, %163 : vector<8x32xf32>
    %167 = arith.addf %165, %166 : vector<8x32xf32>
    %168 = math.tanh %167 : vector<8x32xf32>
    %169 = arith.mulf %164, %168 : vector<8x32xf32>
    %170 = arith.index_cast %150 : i32 to index
    %c0_49 = arith.constant 0 : index
    %171 = vector.load %arg13[%170, %c0_49] : memref<64x32xf32, #tpu.memory_space<vmem>>, vector<8x32xf32>
    tpu.vector_store %arg13[%170, %c0_49], %169 {strides = array<i32>} : memref<64x32xf32, #tpu.memory_space<vmem>>, vector<8x32xf32>,
    %c7_i32 = arith.constant 7 : i32
    %c8_i32_50 = arith.constant 8 : i32
    %172 = arith.muli %c7_i32, %c8_i32_50 : i32
    %173 = tpu.assume_multiple %172, 8 : i32
    %174 = arith.index_cast %173 : i32 to index
    %c0_51 = arith.constant 0 : index
    %175 = vector.load %arg12[%174, %c0_51] : memref<64x128xf32, #tpu.memory_space<vmem>>, vector<8x128xf32>
    %cst_52 = arith.constant dense<0.000000e+00> : vector<8x128xf32>
    %176 = tpu.matmul %169, %8, %cst_52 {dimension_numbers = #tpu.dot_dimension_numbers<[1], [0], [0], [1], [0, 0, 1, 1], [], []>} : vector<8x32xf32>, vector<32x128xf32>, vector<8x128xf32> -> vector<8x128xf32>
    %177 = arith.addf %175, %176 : vector<8x128xf32>
    %178 = arith.negf %177 : vector<8x128xf32>
    %179 = math.exp %178 : vector<8x128xf32>
    %cst_53 = arith.constant 1.000000e+00 : f32
    %180 = vector.broadcast %cst_53 : f32 to vector<8x128xf32>
    %181 = arith.addf %180, %179 : vector<8x128xf32>
    %182 = arith.divf %180, %181 : vector<8x128xf32>
    %183 = math.tanh %177 : vector<8x128xf32>
    %184 = vector.extract_strided_slice %182 {offsets = [0, 0], sizes = [8, 32], strides = [1, 1]} : vector<8x128xf32> to vector<8x32xf32>
    %185 = vector.extract_strided_slice %182 {offsets = [0, 32], sizes = [8, 32], strides = [1, 1]} : vector<8x128xf32> to vector<8x32xf32>
    %186 = vector.extract_strided_slice %183 {offsets = [0, 64], sizes = [8, 32], strides = [1, 1]} : vector<8x128xf32> to vector<8x32xf32>
    %187 = vector.extract_strided_slice %182 {offsets = [0, 96], sizes = [8, 32], strides = [1, 1]} : vector<8x128xf32> to vector<8x32xf32>
    %188 = arith.mulf %185, %167 : vector<8x32xf32>
    %189 = arith.mulf %184, %186 : vector<8x32xf32>
    %190 = arith.addf %188, %189 : vector<8x32xf32>
    %191 = math.tanh %190 : vector<8x32xf32>
    %192 = arith.mulf %187, %191 : vector<8x32xf32>
    %193 = arith.index_cast %173 : i32 to index
    %c0_54 = arith.constant 0 : index
    %194 = vector.load %arg13[%193, %c0_54] : memref<64x32xf32, #tpu.memory_space<vmem>>, vector<8x32xf32>
    tpu.vector_store %arg13[%193, %c0_54], %192 {strides = array<i32>} : memref<64x32xf32, #tpu.memory_space<vmem>>, vector<8x32xf32>,
    %c8_i32_55 = arith.constant 8 : i32
    %c0_56 = arith.constant 0 : index
    %c0_57 = arith.constant 0 : index
    %195 = vector.load %arg13[%c0_56, %c0_57] : memref<64x32xf32, #tpu.memory_space<vmem>>, vector<64x32xf32>
    %c0_58 = arith.constant 0 : index
    %c0_59 = arith.constant 0 : index
    %196 = vector.load %arg8[%c0_58, %c0_59] : memref<32x128xf32, #tpu.memory_space<vmem>>, vector<32x128xf32>
    %cst_60 = arith.constant dense<0.000000e+00> : vector<64x128xf32>
    %197 = tpu.matmul %195, %196, %cst_60 {dimension_numbers = #tpu.dot_dimension_numbers<[1], [0], [0], [1], [0, 0, 1, 1], [], []>} : vector<64x32xf32>, vector<32x128xf32>, vector<64x128xf32> -> vector<64x128xf32>
    %c0_61 = arith.constant 0 : index
    %c0_62 = arith.constant 0 : index
    %198 = vector.load %arg9[%c0_61, %c0_62] : memref<1x128xf32, #tpu.memory_space<vmem>>, vector<1x128xf32>
    %199 = vector.broadcast %198 : vector<1x128xf32> to vector<64x128xf32>
    %200 = arith.addf %197, %199 : vector<64x128xf32>
    %c0_63 = arith.constant 0 : index
    %c0_64 = arith.constant 0 : index
    %201 = vector.load %arg10[%c0_63, %c0_64] : memref<64x128xf32, #tpu.memory_space<vmem>>, vector<64x128xf32>
    tpu.vector_store %arg10[%c0_63, %c0_64], %200 {strides = array<i32>} : memref<64x128xf32, #tpu.memory_space<vmem>>, vector<64x128xf32>,
    return
  }
  func.func @transform_0(%arg0: i32, %arg1: memref<64xi32, #tpu.memory_space<smem>>) -> (i32, i32) {
    %c0_i32 = arith.constant 0 : i32
    %c0_i32_0 = arith.constant 0 : i32
    %c0_i32_1 = arith.constant 0 : i32
    return %c0_i32, %c0_i32_0 : i32, i32
  }
  func.func @transform_1(%arg0: i32, %arg1: memref<64xi32, #tpu.memory_space<smem>>) -> (i32, i32) {
    %c0_i32 = arith.constant 0 : i32
    %c0_i32_0 = arith.constant 0 : i32
    %c0_i32_1 = arith.constant 0 : i32
    return %c0_i32, %c0_i32_0 : i32, i32
  }
  func.func @transform_2(%arg0: i32, %arg1: memref<64xi32, #tpu.memory_space<smem>>) -> (i32, i32) {
    %c0_i32 = arith.constant 0 : i32
    %c0_i32_0 = arith.constant 0 : i32
    %c0_i32_1 = arith.constant 0 : i32
    return %c0_i32, %c0_i32_0 : i32, i32
  }
  func.func @transform_3(%arg0: i32, %arg1: memref<64xi32, #tpu.memory_space<smem>>) -> (i32, i32) {
    %c0_i32 = arith.constant 0 : i32
    %c0_i32_0 = arith.constant 0 : i32
    %c0_i32_1 = arith.constant 0 : i32
    return %c0_i32, %c0_i32_0 : i32, i32
  }
  func.func @transform_4(%arg0: i32, %arg1: memref<64xi32, #tpu.memory_space<smem>>) -> (i32, i32) {
    %c0_i32 = arith.constant 0 : i32
    %c0_i32_0 = arith.constant 0 : i32
    %c0_i32_1 = arith.constant 0 : i32
    return %c0_i32, %c0_i32_0 : i32, i32
  }
  func.func @transform_5(%arg0: i32, %arg1: memref<64xi32, #tpu.memory_space<smem>>) -> (i32, i32) {
    %c0_i32 = arith.constant 0 : i32
    %c0_i32_0 = arith.constant 0 : i32
    %c0_i32_1 = arith.constant 0 : i32
    return %c0_i32, %c0_i32_0 : i32, i32
  }
  func.func @transform_6(%arg0: i32, %arg1: memref<64xi32, #tpu.memory_space<smem>>) -> (i32, i32) {
    %c0_i32 = arith.constant 0 : i32
    %c0_i32_0 = arith.constant 0 : i32
    %c0_i32_1 = arith.constant 0 : i32
    return %c0_i32, %c0_i32_0 : i32, i32
  }
  func.func @transform_7(%arg0: i32, %arg1: memref<64xi32, #tpu.memory_space<smem>>) -> (i32, i32) {
    %c0_i32 = arith.constant 0 : i32
    %c0_i32_0 = arith.constant 0 : i32
    %c0_i32_1 = arith.constant 0 : i32
    return %c0_i32, %c0_i32_0 : i32, i32
  }
  func.func @transform_8(%arg0: i32, %arg1: memref<64xi32, #tpu.memory_space<smem>>) -> (i32, i32) {
    %c0_i32 = arith.constant 0 : i32
    %c0_i32_0 = arith.constant 0 : i32
    %c0_i32_1 = arith.constant 0 : i32
    return %c0_i32, %c0_i32_0 : i32, i32
  }
}

</mosaic_0001>

<llo_original>
// kernel: tpu_custom_call.1
$region0: #{tpu_custom_call.1}
  #allocation0 [shape = 'u32[]', space=smem, size = 0x4, offset = 0x4, fixed_abs, tag = 'smem constant byte address 0x4 - core index']
  #allocation1 [shape = 'u32[144,128]{1,0:T(1,128)}', space=vmem, size = 0x12000, scoped, tag = 'internal scratch']
  #allocation2 [shape = 'f32[20,128]{1,0:T(8,128)}', space=vmem, size = 0x3000, scoped, tag = 'scratch operand']
  #allocation3 [shape = 'f32[64,128]{1,0:T(8,128)}', space=vmem, size = 0x8000, scoped, tag = 'scratch operand']
  #allocation4 [shape = 'f32[64,32]{1,0:T(8,128)}', space=vmem, size = 0x8000, scoped, tag = 'scratch operand']
  #allocation5 [shape = 's32[1]{0}', space=sflag, size = 0x4, scoped, tag = 'scoped memory for tpu_custom_call.1']
  #allocation6 [shape = 'u8[512]{0}', space=smem, size = 0x200, scoped, tag = 'prefetched SMEM operand 0']
  %s0 = inlined_call_operand.hbm [shape: s32[64], index: 0, kind: input, shape index: {}]
  %s1 = inlined_call_operand.hbm [shape: f32[20,32], index: 1, kind: input, shape index: {}]
  %s2 = inlined_call_operand.hbm [shape: f32[8,32], index: 2, kind: input, shape index: {}]
  %s3 = inlined_call_operand.hbm [shape: f32[8,32], index: 3, kind: input, shape index: {}]
  %s4 = inlined_call_operand.hbm [shape: f32[32,128], index: 4, kind: input, shape index: {}]
  %s5 = inlined_call_operand.hbm [shape: f32[32,128], index: 5, kind: input, shape index: {}]
  %s6 = inlined_call_operand.vmem [shape: f32[1,128], index: 6, kind: input, shape index: {}]
  %s7 = inlined_call_operand.hbm [shape: f32[32,128], index: 7, kind: input, shape index: {}]
  %s8 = inlined_call_operand.vmem [shape: f32[1,128], index: 8, kind: input, shape index: {}]
  %s9 = inlined_call_operand.hbm [shape: f32[64,128], index: 9, kind: output, shape index: {}]
  %s10 = sld [smem:[#allocation0]]
  $region73: #{tpu_custom_call.1} parent=0
    _
  %s12 = ssub.s32 1, %s10
  %s13 = scalar_select 0, %s12, %s10
  %15 = dma.hbm_to_smem %s0, 16, [#allocation6], [#allocation5]
  %16 = dma.done [#allocation5], 16
  %17 = sfence
  $region1: #{tpu_custom_call.1} parent=0
    #allocation7 [shape = 'u8[12288]{0}', space=vmem, size = 0x3000, scoped, tag = 'input window, operand 1, single buffered']
    #allocation8 [shape = 's32[1]{0}', space=sflag, size = 0x4, scoped, tag = 'scoped memory for tpu_custom_call.1']
    #allocation9 [shape = 's32[1]{0}', space=sflag, size = 0x4, scoped, tag = 'scoped memory for tpu_custom_call.1']
    #allocation10 [shape = 'u8[4096]{0}', space=vmem, size = 0x1000, scoped, tag = 'input window, operand 2, single buffered']
    #allocation11 [shape = 's32[1]{0}', space=sflag, size = 0x4, scoped, tag = 'scoped memory for tpu_custom_call.1']
    #allocation12 [shape = 'u8[4096]{0}', space=vmem, size = 0x1000, scoped, tag = 'input window, operand 3, single buffered']
    #allocation13 [shape = 'u8[16384]{0}', space=vmem, size = 0x4000, scoped, tag = 'input window, operand 4, single buffered']
    #allocation14 [shape = 's32[1]{0}', space=sflag, size = 0x4, scoped, tag = 'scoped memory for tpu_custom_call.1']
    #allocation15 [shape = 'u8[16384]{0}', space=vmem, size = 0x4000, scoped, tag = 'input window, operand 5, single buffered']
    #allocation16 [shape = 'u8[16384]{0}', space=vmem, size = 0x4000, scoped, tag = 'input window, operand 7, single buffered']
    #allocation17 [shape = 's32[1]{0}', space=sflag, size = 0x4, scoped, tag = 'scoped memory for tpu_custom_call.1']
    #allocation18 [shape = 'u8[32768]{0}', space=vmem, size = 0x8000, scoped, tag = 'output window, operand 0, single buffered']
    %18 = vsyncpa [#allocation8], 0
    %19 = vsyncpa [#allocation11], 0
    %20 = vsyncpa [#allocation14], 0
    %21 = vsyncpa [#allocation17], 0
    %22 = vsyncpa [#allocation9], 0
    // Predicated region
    $region2: #{tpu_custom_call.1} parent=1 // pred_check
      _
    $region3: #{tpu_custom_call.1} parent=1 // pred_check_branch
      %24 = sbr.rel (0) target = $region5
    $region4: #{tpu_custom_call.1} parent=1 // pred_region
      %s26 = ssub.s32 384, 384
      %27 = vsyncadd [#allocation8], %s26
      %s28 = sshll.u32 [#allocation7], 4
      %s29 = int_to_ptr.vmem [resolvable:$true] %s28
      %34 = dma.hbm_to_vmem [thread:$0]  %s1, 384, %s29, [#allocation8], 128, 128, 8
    $region5: #{tpu_custom_call.1} parent=1 // pred_fallthru
      _
    // Predicated region
    $region6: #{tpu_custom_call.1} parent=1 // pred_check
      _
    $region7: #{tpu_custom_call.1} parent=1 // pred_check_branch
      %36 = sbr.rel (0) target = $region9
    $region8: #{tpu_custom_call.1} parent=1 // pred_region
      %s38 = ssub.s32 128, 128
      %39 = vsyncadd [#allocation11], %s38
      %s41 = sshll.u32 [#allocation10], 4
      %s42 = int_to_ptr.vmem [resolvable:$true] %s41
      %44 = dma.hbm_to_vmem [thread:$0]  %s2, 128, %s42, [#allocation11]
    $region9: #{tpu_custom_call.1} parent=1 // pred_fallthru
      _
    // Predicated region
    $region10: #{tpu_custom_call.1} parent=1 // pred_check
      _
    $region11: #{tpu_custom_call.1} parent=1 // pred_check_branch
      %46 = sbr.rel (0) target = $region13
    $region12: #{tpu_custom_call.1} parent=1 // pred_region
      %s48 = ssub.s32 128, 128
      %49 = vsyncadd [#allocation11], %s48
      %s51 = sshll.u32 [#allocation12], 4
      %s52 = int_to_ptr.vmem [resolvable:$true] %s51
      %54 = dma.hbm_to_vmem [thread:$0]  %s3, 128, %s52, [#allocation11]
    $region13: #{tpu_custom_call.1} parent=1 // pred_fallthru
      _
    // Predicated region
    $region14: #{tpu_custom_call.1} parent=1 // pred_check
      _
    $region15: #{tpu_custom_call.1} parent=1 // pred_check_branch
      %56 = sbr.rel (0) target = $region17
    $region16: #{tpu_custom_call.1} parent=1 // pred_region
      %s58 = ssub.s32 512, 512
      %59 = vsyncadd [#allocation14], %s58
      %s60 = sshll.u32 [#allocation13], 4
      %s61 = int_to_ptr.vmem [resolvable:$true] %s60
      %66 = dma.hbm_to_vmem [thread:$0]  %s4, 512, %s61, [#allocation14], 128, 128, 8
    $region17: #{tpu_custom_call.1} parent=1 // pred_fallthru
      _
    // Predicated region
    $region18: #{tpu_custom_call.1} parent=1 // pred_check
      _
    $region19: #{tpu_custom_call.1} parent=1 // pred_check_branch
      %68 = sbr.rel (0) target = $region21
    $region20: #{tpu_custom_call.1} parent=1 // pred_region
      %s70 = ssub.s32 512, 512
      %71 = vsyncadd [#allocation14], %s70
      %s72 = sshll.u32 [#allocation15], 4
      %s73 = int_to_ptr.vmem [resolvable:$true] %s72
      %78 = dma.hbm_to_vmem [thread:$0]  %s5, 512, %s73, [#allocation14], 128, 128, 8
    $region21: #{tpu_custom_call.1} parent=1 // pred_fallthru
      _
    // Predicated region
    $region22: #{tpu_custom_call.1} parent=1 // pred_check
      _
    $region23: #{tpu_custom_call.1} parent=1 // pred_check_branch
      %80 = sbr.rel (0) target = $region25
    $region24: #{tpu_custom_call.1} parent=1 // pred_region
      _
    $region25: #{tpu_custom_call.1} parent=1 // pred_fallthru
      _
    // Predicated region
    $region26: #{tpu_custom_call.1} parent=1 // pred_check
      _
    $region27: #{tpu_custom_call.1} parent=1 // pred_check_branch
      %82 = sbr.rel (0) target = $region29
    $region28: #{tpu_custom_call.1} parent=1 // pred_region
      %s84 = ssub.s32 512, 512
      %85 = vsyncadd [#allocation17], %s84
      %s86 = sshll.u32 [#allocation16], 4
      %s87 = int_to_ptr.vmem [resolvable:$true] %s86
      %92 = dma.hbm_to_vmem [thread:$0]  %s7, 512, %s87, [#allocation17], 128, 128, 8
    $region29: #{tpu_custom_call.1} parent=1 // pred_fallthru
      _
    // Predicated region
    $region30: #{tpu_custom_call.1} parent=1 // pred_check
      _
    $region31: #{tpu_custom_call.1} parent=1 // pred_check_branch
      %94 = sbr.rel (0) target = $region33
    $region32: #{tpu_custom_call.1} parent=1 // pred_region
      _
    $region33: #{tpu_custom_call.1} parent=1 // pred_fallthru
      _
    // Predicated region
    $region34: #{tpu_custom_call.1} parent=1 // pred_check
      _
    $region35: #{tpu_custom_call.1} parent=1 // pred_check_branch
      %96 = sbr.rel (0) target = $region37
    $region36: #{tpu_custom_call.1} parent=1 // pred_region
      %97 = dma.done [#allocation8], 384
    $region37: #{tpu_custom_call.1} parent=1 // pred_fallthru
      _
    // Predicated region
    $region38: #{tpu_custom_call.1} parent=1 // pred_check
      _
    $region39: #{tpu_custom_call.1} parent=1 // pred_check_branch
      %99 = sbr.rel (0) target = $region41
    $region40: #{tpu_custom_call.1} parent=1 // pred_region
      %100 = dma.done [#allocation11], 128
    $region41: #{tpu_custom_call.1} parent=1 // pred_fallthru
      _
    // Predicated region
    $region42: #{tpu_custom_call.1} parent=1 // pred_check
      _
    $region43: #{tpu_custom_call.1} parent=1 // pred_check_branch
      %102 = sbr.rel (0) target = $region45
    $region44: #{tpu_custom_call.1} parent=1 // pred_region
      %103 = dma.done [#allocation11], 128
    $region45: #{tpu_custom_call.1} parent=1 // pred_fallthru
      _
    // Predicated region
    $region46: #{tpu_custom_call.1} parent=1 // pred_check
      _
    $region47: #{tpu_custom_call.1} parent=1 // pred_check_branch
      %105 = sbr.rel (0) target = $region49
    $region48: #{tpu_custom_call.1} parent=1 // pred_region
      %106 = dma.done [#allocation14], 512
    $region49: #{tpu_custom_call.1} parent=1 // pred_fallthru
      _
    // Predicated region
    $region50: #{tpu_custom_call.1} parent=1 // pred_check
      _
    $region51: #{tpu_custom_call.1} parent=1 // pred_check_branch
      %108 = sbr.rel (0) target = $region53
    $region52: #{tpu_custom_call.1} parent=1 // pred_region
      %109 = dma.done [#allocation14], 512
    $region53: #{tpu_custom_call.1} parent=1 // pred_fallthru
      _
    // Predicated region
    $region54: #{tpu_custom_call.1} parent=1 // pred_check
      _
    $region55: #{tpu_custom_call.1} parent=1 // pred_check_branch
      %111 = sbr.rel (0) target = $region57
    $region56: #{tpu_custom_call.1} parent=1 // pred_region
      %112 = dma.done [#allocation17], 512
    $region57: #{tpu_custom_call.1} parent=1 // pred_fallthru
      _
    %v113 = vld [vmem:[#allocation7] sm:$0xff]
    %v114 = vld [vmem:[#allocation7 + $0x8] sm:$0xff]
    %v115 = vld [vmem:[#allocation7 + $0x10] sm:$0xf]
    %v116 = vld [vmem:[#allocation13] sm:$0xff]
    %v117 = vld [vmem:[#allocation13 + $0x8] sm:$0xff]
    %v118 = vld [vmem:[#allocation13 + $0x10] sm:$0xff]
    %v119 = vld [vmem:[#allocation13 + $0x18] sm:$0xff]
    %v120 = vld [vmem:[%s6] sm:$0x1]
    %v122 = vlaneseq
    %v123 = vshrl.u32 %v122, 7
    %v124 = vsub.s32 0, %v123
    %v125 = vrot.slane %v120, %v124
    %vm127 = vcmask 261120
    %v129 = vsel %vm127, %v113, 0
    %v132 = vsel %vm127, %v114, 0
    %v135 = vsel %vm127, %v115, 0
    %137 = vmatprep.subr.mxu0 0.0
    %138 = vmatpush1.msra.mxu0 0.0
    %139 = vmatprep.subr.mxu0 0.0
    %140 = vmatpush1.msra.mxu0 0.0
    %141 = vmatprep.subr.mxu0 0.0
    %142 = vmatpush1.msra.mxu0 0.0
    %143 = vmatprep.subr.mxu0 0.0
    %144 = vmatpush1.msra.mxu0 0.0
    %145 = vmatprep.subr.mxu0 0.0
    %146 = vmatpush1.msra.mxu0 0.0
    %147 = vmatprep.subr.mxu0 0.0
    %148 = vmatpush1.msra.mxu0 0.0
    %149 = vmatprep.subr.mxu0 0.0
    %150 = vmatpush1.msra.mxu0 0.0
    %151 = vmatprep.subr.mxu0 0.0
    %152 = vmatpush1.msra.mxu0 0.0
    %153 = vmatprep.subr.mxu0 0.0
    %154 = vmatpush1.msra.mxu0 0.0
    %155 = vmatprep.subr.mxu0 0.0
    %156 = vmatpush1.msra.mxu0 0.0
    %157 = vmatprep.subr.mxu0 0.0
    %158 = vmatpush1.msra.mxu0 0.0
    %159 = vmatprep.subr.mxu0 0.0
    %160 = vmatpush1.msra.mxu0 0.0
    %161 = vmatprep.subr.mxu0 0.0
    %162 = vmatpush1.msra.mxu0 %v119
    %163 = vmatprep.subr.mxu0 0.0
    %164 = vmatpush1.msra.mxu0 %v118
    %165 = vmatprep.subr.mxu0 0.0
    %166 = vmatpush1.msra.mxu0 %v117
    %167 = vmatprep.subr.mxu0 0.0
    %168 = vmatpush1.msra.mxu0 %v116
    %169 = vmatprep.subr.mxu0 0.0
    %170 = vmatpush2.msra.mxu0 0.0
    %171 = vmatprep.subr.mxu0 0.0
    %172 = vmatpush2.msra.mxu0 0.0
    %173 = vmatprep.subr.mxu0 0.0
    %174 = vmatpush2.msra.mxu0 0.0
    %175 = vmatprep.subr.mxu0 0.0
    %176 = vmatpush2.msra.mxu0 0.0
    %177 = vmatprep.subr.mxu0 0.0
    %178 = vmatpush2.msra.mxu0 0.0
    %179 = vmatprep.subr.mxu0 0.0
    %180 = vmatpush2.msra.mxu0 0.0
    %181 = vmatprep.subr.mxu0 0.0
    %182 = vmatpush2.msra.mxu0 0.0
    %183 = vmatprep.subr.mxu0 0.0
    %184 = vmatpush2.msra.mxu0 0.0
    %185 = vmatprep.subr.mxu0 0.0
    %186 = vmatpush2.msra.mxu0 0.0
    %187 = vmatprep.subr.mxu0 0.0
    %188 = vmatpush2.msra.mxu0 0.0
    %189 = vmatprep.subr.mxu0 0.0
    %190 = vmatpush2.msra.mxu0 0.0
    %191 = vmatprep.subr.mxu0 0.0
    %192 = vmatpush2.msra.mxu0 0.0
    %193 = vmatprep.subr.mxu0 0.0
    %194 = vmatpush2.msra.mxu0 0.0
    %195 = vmatprep.subr.mxu0 0.0
    %196 = vmatpush2.msra.mxu0 0.0
    %197 = vmatprep.subr.mxu0 0.0
    %198 = vmatpush2.msra.mxu0 0.0
    %199 = vmatprep.subr.mxu0 0.0
    %200 = vmatpush2.msra.mxu0 0.0
    %201 = vmatprep.mubr.f32.mxu0 0.0
    %202 = vmatmul.mubr.f32.gmra.mxu0 %v129
    %v203 = vpop.f32.mrf.mxu0
    %v204 = vadd.f32 %v125, %v203
    %v205 = vpop.f32.mrf.mxu0
    %206 = vmatprep.mubr.f32.mxu0 0.0
    %207 = vmatmul.mubr.f32.gmra.mxu0 %v132
    %v208 = vpop.f32.mrf.mxu0
    %v209 = vadd.f32 %v125, %v208
    %v210 = vpop.f32.mrf.mxu0
    %211 = vmatprep.mubr.f32.mxu0 0.0
    %212 = vmatmul.mubr.f32.gmra.mxu0 %v135
    %v213 = vpop.f32.mrf.mxu0
    %v214 = vadd.f32 %v125, %v213
    %v215 = vpop.f32.mrf.mxu0
    %216 = vdwg.mxu0
    %217 = vst [vmem:[#allocation2] sm:$0xff] %v204
    %218 = vst [vmem:[#allocation2 + $0x8] sm:$0xff] %v209
    %219 = vst [vmem:[#allocation2 + $0x10] sm:$0xf] %v214
    loop: start=0, step=1, limit=64
    $region58: #{tpu_custom_call.1} parent=1 // loop_pre_header
      _
    $region59: #{tpu_custom_call.1} parent=1 // loop_header
      %s221 = sphi 0, %s225
      %p222 = scmp.ge.s32.totalorder %s221, 64
    $region60: #{tpu_custom_call.1} parent=1 // loop_header_branch
      %224 = sbr.rel (%p222) target = $region64
    $region61: #{tpu_custom_call.1} parent=1 // loop_body
      %s226 = sld [smem:[#allocation6 + %s221]]
      %s227 = scalar_lea.vmem [#allocation2], %s226
      %v228 = vld [vmem:[%s227] sm:$0x1]
      %s229 = scalar_lea.vmem [#allocation3], %s221
      %230 = vst [vmem:[%s229] sm:$0x1] %v228
    $region62: #{tpu_custom_call.1} parent=1 // loop_footer
      %s225 = sadd.s32 1, %s221
    $region63: #{tpu_custom_call.1} parent=1 // loop_footer_branch
      %220 = sbr.rel target = $region59
    $region64: #{tpu_custom_call.1} parent=1 // loop_exit
      _
    %v231 = vld [vmem:[#allocation15] sm:$0xff]
    %v232 = vld [vmem:[#allocation15 + $0x8] sm:$0xff]
    %v233 = vld [vmem:[#allocation15 + $0x10] sm:$0xff]
    %v234 = vld [vmem:[#allocation15 + $0x18] sm:$0xff]
    %v235 = vld [vmem:[#allocation10] sm:$0xff]
    %v236 = vld [vmem:[#allocation12] sm:$0xff]
    %v237 = vld [vmem:[#allocation3] sm:$0xff]
    %v239 = vsel %vm127, %v235, 0
    %241 = vmatprep.subr.mxu0 0.0
    %242 = vmatpush1.msra.mxu0 0.0
    %243 = vmatprep.subr.mxu0 0.0
    %244 = vmatpush1.msra.mxu0 0.0
    %245 = vmatprep.subr.mxu0 0.0
    %246 = vmatpush1.msra.mxu0 0.0
    %247 = vmatprep.subr.mxu0 0.0
    %248 = vmatpush1.msra.mxu0 0.0
    %249 = vmatprep.subr.mxu0 0.0
    %250 = vmatpush1.msra.mxu0 0.0
    %251 = vmatprep.subr.mxu0 0.0
    %252 = vmatpush1.msra.mxu0 0.0
    %253 = vmatprep.subr.mxu0 0.0
    %254 = vmatpush1.msra.mxu0 0.0
    %255 = vmatprep.subr.mxu0 0.0
    %256 = vmatpush1.msra.mxu0 0.0
    %257 = vmatprep.subr.mxu0 0.0
    %258 = vmatpush1.msra.mxu0 0.0
    %259 = vmatprep.subr.mxu0 0.0
    %260 = vmatpush1.msra.mxu0 0.0
    %261 = vmatprep.subr.mxu0 0.0
    %262 = vmatpush1.msra.mxu0 0.0
    %263 = vmatprep.subr.mxu0 0.0
    %264 = vmatpush1.msra.mxu0 0.0
    %265 = vmatprep.subr.mxu0 0.0
    %266 = vmatpush1.msra.mxu0 %v234
    %267 = vmatprep.subr.mxu0 0.0
    %268 = vmatpush1.msra.mxu0 %v233
    %269 = vmatprep.subr.mxu0 0.0
    %270 = vmatpush1.msra.mxu0 %v232
    %271 = vmatprep.subr.mxu0 0.0
    %272 = vmatpush1.msra.mxu0 %v231
    %273 = vmatprep.subr.mxu0 0.0
    %274 = vmatpush2.msra.mxu0 0.0
    %275 = vmatprep.subr.mxu0 0.0
    %276 = vmatpush2.msra.mxu0 0.0
    %277 = vmatprep.subr.mxu0 0.0
    %278 = vmatpush2.msra.mxu0 0.0
    %279 = vmatprep.subr.mxu0 0.0
    %280 = vmatpush2.msra.mxu0 0.0
    %281 = vmatprep.subr.mxu0 0.0
    %282 = vmatpush2.msra.mxu0 0.0
    %283 = vmatprep.subr.mxu0 0.0
    %284 = vmatpush2.msra.mxu0 0.0
    %285 = vmatprep.subr.mxu0 0.0
    %286 = vmatpush2.msra.mxu0 0.0
    %287 = vmatprep.subr.mxu0 0.0
    %288 = vmatpush2.msra.mxu0 0.0
    %289 = vmatprep.subr.mxu0 0.0
    %290 = vmatpush2.msra.mxu0 0.0
    %291 = vmatprep.subr.mxu0 0.0
    %292 = vmatpush2.msra.mxu0 0.0
    %293 = vmatprep.subr.mxu0 0.0
    %294 = vmatpush2.msra.mxu0 0.0
    %295 = vmatprep.subr.mxu0 0.0
    %296 = vmatpush2.msra.mxu0 0.0
    %297 = vmatprep.subr.mxu0 0.0
    %298 = vmatpush2.msra.mxu0 0.0
    %299 = vmatprep.subr.mxu0 0.0
    %300 = vmatpush2.msra.mxu0 0.0
    %301 = vmatprep.subr.mxu0 0.0
    %302 = vmatpush2.msra.mxu0 0.0
    %303 = vmatprep.subr.mxu0 0.0
    %304 = vmatpush2.msra.mxu0 0.0
    %305 = vmatprep.mubr.f32.mxu0 0.0
    %306 = vmatmul.mubr.f32.gmra.mxu0 %v239
    %v307 = vpop.f32.mrf.mxu0
    %v308 = vadd.f32 0.0, %v307
    %v309 = vpop.f32.mrf.mxu0
    %310 = vdwg.mxu0
    %v311 = vadd.f32 %v237, %v308
    %v312 = vxor.u32 %v311, 2147483648
    %v313 = vmul.f32 %v312, 1.442695
    %v314 = vpow.pop %v313
    %v315 = vadd.f32 %v314, 1.0
    %v316 = vrcp.pop %v315
    %v317 = vmul.f32 1.0, %v316
    %v318 = vtanh.pop %v311
    %320 = vrot.lane.b32.xlu0 %v236, 32
    %v321 = vpop.permute.xlu0 %320
    %v323 = vmul.f32 %v317, %v321
    %325 = vrot.lane.b32.xlu0 %v318, 64
    %v326 = vpop.permute.xlu0 %325
    %v328 = vmul.f32 %v317, %v326
    %330 = vrot.lane.b32.xlu0 %v328, 32
    %v331 = vpop.permute.xlu0 %330
    %v333 = vadd.f32 %v323, %v331
    %v334 = vtanh.pop %v333
    %336 = vrot.lane.b32.xlu0 %v334, 64
    %v337 = vpop.permute.xlu0 %336
    %v339 = vmul.f32 %v317, %v337
    %341 = vrot.lane.b32.xlu0 %v339, 32
    %v342 = vpop.permute.xlu0 %341
    %344 = vst.msk [vmem:[#allocation4] sm:$0xff] %vm127, %v342
    %s345 = scalar_lea.vmem [#allocation3], 8
    %v346 = vld [vmem:[%s345] sm:$0xff]
    %v347 = vsel %vm127, %v342, 0
    %349 = vmatprep.subr.mxu0 0.0
    %350 = vmatpush1.msra.mxu0 0.0
    %351 = vmatprep.subr.mxu0 0.0
    %352 = vmatpush1.msra.mxu0 0.0
    %353 = vmatprep.subr.mxu0 0.0
    %354 = vmatpush1.msra.mxu0 0.0
    %355 = vmatprep.subr.mxu0 0.0
    %356 = vmatpush1.msra.mxu0 0.0
    %357 = vmatprep.subr.mxu0 0.0
    %358 = vmatpush1.msra.mxu0 0.0
    %359 = vmatprep.subr.mxu0 0.0
    %360 = vmatpush1.msra.mxu0 0.0
    %361 = vmatprep.subr.mxu0 0.0
    %362 = vmatpush1.msra.mxu0 0.0
    %363 = vmatprep.subr.mxu0 0.0
    %364 = vmatpush1.msra.mxu0 0.0
    %365 = vmatprep.subr.mxu0 0.0
    %366 = vmatpush1.msra.mxu0 0.0
    %367 = vmatprep.subr.mxu0 0.0
    %368 = vmatpush1.msra.mxu0 0.0
    %369 = vmatprep.subr.mxu0 0.0
    %370 = vmatpush1.msra.mxu0 0.0
    %371 = vmatprep.subr.mxu0 0.0
    %372 = vmatpush1.msra.mxu0 0.0
    %373 = vmatprep.subr.mxu0 0.0
    %374 = vmatpush1.msra.mxu0 %v234
    %375 = vmatprep.subr.mxu0 0.0
    %376 = vmatpush1.msra.mxu0 %v233
    %377 = vmatprep.subr.mxu0 0.0
    %378 = vmatpush1.msra.mxu0 %v232
    %379 = vmatprep.subr.mxu0 0.0
    %380 = vmatpush1.msra.mxu0 %v231
    %381 = vmatprep.subr.mxu0 0.0
    %382 = vmatpush2.msra.mxu0 0.0
    %383 = vmatprep.subr.mxu0 0.0
    %384 = vmatpush2.msra.mxu0 0.0
    %385 = vmatprep.subr.mxu0 0.0
    %386 = vmatpush2.msra.mxu0 0.0
    %387 = vmatprep.subr.mxu0 0.0
    %388 = vmatpush2.msra.mxu0 0.0
    %389 = vmatprep.subr.mxu0 0.0
    %390 = vmatpush2.msra.mxu0 0.0
    %391 = vmatprep.subr.mxu0 0.0
    %392 = vmatpush2.msra.mxu0 0.0
    %393 = vmatprep.subr.mxu0 0.0
    %394 = vmatpush2.msra.mxu0 0.0
    %395 = vmatprep.subr.mxu0 0.0
    %396 = vmatpush2.msra.mxu0 0.0
    %397 = vmatprep.subr.mxu0 0.0
    %398 = vmatpush2.msra.mxu0 0.0
    %399 = vmatprep.subr.mxu0 0.0
    %400 = vmatpush2.msra.mxu0 0.0
    %401 = vmatprep.subr.mxu0 0.0
    %402 = vmatpush2.msra.mxu0 0.0
    %403 = vmatprep.subr.mxu0 0.0
    %404 = vmatpush2.msra.mxu0 0.0
    %405 = vmatprep.subr.mxu0 0.0
    %406 = vmatpush2.msra.mxu0 0.0
    %407 = vmatprep.subr.mxu0 0.0
    %408 = vmatpush2.msra.mxu0 0.0
    %409 = vmatprep.subr.mxu0 0.0
    %410 = vmatpush2.msra.mxu0 0.0
    %411 = vmatprep.subr.mxu0 0.0
    %412 = vmatpush2.msra.mxu0 0.0
    %413 = vmatprep.mubr.f32.mxu0 0.0
    %414 = vmatmul.mubr.f32.gmra.mxu0 %v347
    %v415 = vpop.f32.mrf.mxu0
    %v416 = vadd.f32 0.0, %v415
    %v417 = vpop.f32.mrf.mxu0
    %418 = vdwg.mxu0
    %v419 = vadd.f32 %v346, %v416
    %v420 = vxor.u32 %v419, 2147483648
    %v421 = vmul.f32 %v420, 1.442695
    %v422 = vpow.pop %v421
    %v423 = vadd.f32 %v422, 1.0
    %v424 = vrcp.pop %v423
    %v425 = vmul.f32 1.0, %v424
    %v426 = vtanh.pop %v419
    %v427 = vmul.f32 %v425, %v333
    %429 = vrot.lane.b32.xlu0 %v426, 64
    %v430 = vpop.permute.xlu0 %429
    %v432 = vmul.f32 %v425, %v430
    %434 = vrot.lane.b32.xlu0 %v432, 32
    %v435 = vpop.permute.xlu0 %434
    %v437 = vadd.f32 %v427, %v435
    %v438 = vtanh.pop %v437
    %440 = vrot.lane.b32.xlu0 %v438, 64
    %v441 = vpop.permute.xlu0 %440
    %v443 = vmul.f32 %v425, %v441
    %445 = vrot.lane.b32.xlu0 %v443, 32
    %v446 = vpop.permute.xlu0 %445
    %s448 = scalar_lea.vmem [#allocation4], 8
    %449 = vst.msk [vmem:[%s448] sm:$0xff] %vm127, %v446
    %s450 = scalar_lea.vmem [#allocation3], 16
    %v451 = vld [vmem:[%s450] sm:$0xff]
    %v452 = vsel %vm127, %v446, 0
    %454 = vmatprep.subr.mxu0 0.0
    %455 = vmatpush1.msra.mxu0 0.0
    %456 = vmatprep.subr.mxu0 0.0
    %457 = vmatpush1.msra.mxu0 0.0
    %458 = vmatprep.subr.mxu0 0.0
    %459 = vmatpush1.msra.mxu0 0.0
    %460 = vmatprep.subr.mxu0 0.0
    %461 = vmatpush1.msra.mxu0 0.0
    %462 = vmatprep.subr.mxu0 0.0
    %463 = vmatpush1.msra.mxu0 0.0
    %464 = vmatprep.subr.mxu0 0.0
    %465 = vmatpush1.msra.mxu0 0.0
    %466 = vmatprep.subr.mxu0 0.0
    %467 = vmatpush1.msra.mxu0 0.0
    %468 = vmatprep.subr.mxu0 0.0
    %469 = vmatpush1.msra.mxu0 0.0
    %470 = vmatprep.subr.mxu0 0.0
    %471 = vmatpush1.msra.mxu0 0.0
    %472 = vmatprep.subr.mxu0 0.0
    %473 = vmatpush1.msra.mxu0 0.0
    %474 = vmatprep.subr.mxu0 0.0
    %475 = vmatpush1.msra.mxu0 0.0
    %476 = vmatprep.subr.mxu0 0.0
    %477 = vmatpush1.msra.mxu0 0.0
    %478 = vmatprep.subr.mxu0 0.0
    %479 = vmatpush1.msra.mxu0 %v234
    %480 = vmatprep.subr.mxu0 0.0
    %481 = vmatpush1.msra.mxu0 %v233
    %482 = vmatprep.subr.mxu0 0.0
    %483 = vmatpush1.msra.mxu0 %v232
    %484 = vmatprep.subr.mxu0 0.0
    %485 = vmatpush1.msra.mxu0 %v231
    %486 = vmatprep.subr.mxu0 0.0
    %487 = vmatpush2.msra.mxu0 0.0
    %488 = vmatprep.subr.mxu0 0.0
    %489 = vmatpush2.msra.mxu0 0.0
    %490 = vmatprep.subr.mxu0 0.0
    %491 = vmatpush2.msra.mxu0 0.0
    %492 = vmatprep.subr.mxu0 0.0
    %493 = vmatpush2.msra.mxu0 0.0
    %494 = vmatprep.subr.mxu0 0.0
    %495 = vmatpush2.msra.mxu0 0.0
    %496 = vmatprep.subr.mxu0 0.0
    %497 = vmatpush2.msra.mxu0 0.0
    %498 = vmatprep.subr.mxu0 0.0
    %499 = vmatpush2.msra.mxu0 0.0
    %500 = vmatprep.subr.mxu0 0.0
    %501 = vmatpush2.msra.mxu0 0.0
    %502 = vmatprep.subr.mxu0 0.0
    %503 = vmatpush2.msra.mxu0 0.0
    %504 = vmatprep.subr.mxu0 0.0
    %505 = vmatpush2.msra.mxu0 0.0
    %506 = vmatprep.subr.mxu0 0.0
    %507 = vmatpush2.msra.mxu0 0.0
    %508 = vmatprep.subr.mxu0 0.0
    %509 = vmatpush2.msra.mxu0 0.0
    %510 = vmatprep.subr.mxu0 0.0
    %511 = vmatpush2.msra.mxu0 0.0
    %512 = vmatprep.subr.mxu0 0.0
    %513 = vmatpush2.msra.mxu0 0.0
    %514 = vmatprep.subr.mxu0 0.0
    %515 = vmatpush2.msra.mxu0 0.0
    %516 = vmatprep.subr.mxu0 0.0
    %517 = vmatpush2.msra.mxu0 0.0
    %518 = vmatprep.mubr.f32.mxu0 0.0
    %519 = vmatmul.mubr.f32.gmra.mxu0 %v452
    %v520 = vpop.f32.mrf.mxu0
    %v521 = vadd.f32 0.0, %v520
    %v522 = vpop.f32.mrf.mxu0
    %523 = vdwg.mxu0
    %v524 = vadd.f32 %v451, %v521
    %v525 = vxor.u32 %v524, 2147483648
    %v526 = vmul.f32 %v525, 1.442695
    %v527 = vpow.pop %v526
    %v528 = vadd.f32 %v527, 1.0
    %v529 = vrcp.pop %v528
    %v530 = vmul.f32 1.0, %v529
    %v531 = vtanh.pop %v524
    %v532 = vmul.f32 %v530, %v437
    %534 = vrot.lane.b32.xlu0 %v531, 64
    %v535 = vpop.permute.xlu0 %534
    %v537 = vmul.f32 %v530, %v535
    %539 = vrot.lane.b32.xlu0 %v537, 32
    %v540 = vpop.permute.xlu0 %539
    %v542 = vadd.f32 %v532, %v540
    %v543 = vtanh.pop %v542
    %545 = vrot.lane.b32.xlu0 %v543, 64
    %v546 = vpop.permute.xlu0 %545
    %v548 = vmul.f32 %v530, %v546
    %550 = vrot.lane.b32.xlu0 %v548, 32
    %v551 = vpop.permute.xlu0 %550
    %s553 = scalar_lea.vmem [#allocation4], 16
    %554 = vst.msk [vmem:[%s553] sm:$0xff] %vm127, %v551
    %s555 = scalar_lea.vmem [#allocation3], 24
    %v556 = vld [vmem:[%s555] sm:$0xff]
    %v557 = vsel %vm127, %v551, 0
    %559 = vmatprep.subr.mxu0 0.0
    %560 = vmatpush1.msra.mxu0 0.0
    %561 = vmatprep.subr.mxu0 0.0
    %562 = vmatpush1.msra.mxu0 0.0
    %563 = vmatprep.subr.mxu0 0.0
    %564 = vmatpush1.msra.mxu0 0.0
    %565 = vmatprep.subr.mxu0 0.0
    %566 = vmatpush1.msra.mxu0 0.0
    %567 = vmatprep.subr.mxu0 0.0
    %568 = vmatpush1.msra.mxu0 0.0
    %569 = vmatprep.subr.mxu0 0.0
    %570 = vmatpush1.msra.mxu0 0.0
    %571 = vmatprep.subr.mxu0 0.0
    %572 = vmatpush1.msra.mxu0 0.0
    %573 = vmatprep.subr.mxu0 0.0
    %574 = vmatpush1.msra.mxu0 0.0
    %575 = vmatprep.subr.mxu0 0.0
    %576 = vmatpush1.msra.mxu0 0.0
    %577 = vmatprep.subr.mxu0 0.0
    %578 = vmatpush1.msra.mxu0 0.0
    %579 = vmatprep.subr.mxu0 0.0
    %580 = vmatpush1.msra.mxu0 0.0
    %581 = vmatprep.subr.mxu0 0.0
    %582 = vmatpush1.msra.mxu0 0.0
    %583 = vmatprep.subr.mxu0 0.0
    %584 = vmatpush1.msra.mxu0 %v234
    %585 = vmatprep.subr.mxu0 0.0
    %586 = vmatpush1.msra.mxu0 %v233
    %587 = vmatprep.subr.mxu0 0.0
    %588 = vmatpush1.msra.mxu0 %v232
    %589 = vmatprep.subr.mxu0 0.0
    %590 = vmatpush1.msra.mxu0 %v231
    %591 = vmatprep.subr.mxu0 0.0
    %592 = vmatpush2.msra.mxu0 0.0
    %593 = vmatprep.subr.mxu0 0.0
    %594 = vmatpush2.msra.mxu0 0.0
    %595 = vmatprep.subr.mxu0 0.0
    %596 = vmatpush2.msra.mxu0 0.0
    %597 = vmatprep.subr.mxu0 0.0
    %598 = vmatpush2.msra.mxu0 0.0
    %599 = vmatprep.subr.mxu0 0.0
    %600 = vmatpush2.msra.mxu0 0.0
    %601 = vmatprep.subr.mxu0 0.0
    %602 = vmatpush2.msra.mxu0 0.0
    %603 = vmatprep.subr.mxu0 0.0
    %604 = vmatpush2.msra.mxu0 0.0
    %605 = vmatprep.subr.mxu0 0.0
    %606 = vmatpush2.msra.mxu0 0.0
    %607 = vmatprep.subr.mxu0 0.0
    %608 = vmatpush2.msra.mxu0 0.0
    %609 = vmatprep.subr.mxu0 0.0
    %610 = vmatpush2.msra.mxu0 0.0
    %611 = vmatprep.subr.mxu0 0.0
    %612 = vmatpush2.msra.mxu0 0.0
    %613 = vmatprep.subr.mxu0 0.0
    %614 = vmatpush2.msra.mxu0 0.0
    %615 = vmatprep.subr.mxu0 0.0
    %616 = vmatpush2.msra.mxu0 0.0
    %617 = vmatprep.subr.mxu0 0.0
    %618 = vmatpush2.msra.mxu0 0.0
    %619 = vmatprep.subr.mxu0 0.0
    %620 = vmatpush2.msra.mxu0 0.0
    %621 = vmatprep.subr.mxu0 0.0
    %622 = vmatpush2.msra.mxu0 0.0
    %623 = vmatprep.mubr.f32.mxu0 0.0
    %624 = vmatmul.mubr.f32.gmra.mxu0 %v557
    %v625 = vpop.f32.mrf.mxu0
    %v626 = vadd.f32 0.0, %v625
    %v627 = vpop.f32.mrf.mxu0
    %628 = vdwg.mxu0
    %v629 = vadd.f32 %v556, %v626
    %v630 = vxor.u32 %v629, 2147483648
    %v631 = vmul.f32 %v630, 1.442695
    %v632 = vpow.pop %v631
    %v633 = vadd.f32 %v632, 1.0
    %v634 = vrcp.pop %v633
    %v635 = vmul.f32 1.0, %v634
    %v636 = vtanh.pop %v629
    %v637 = vmul.f32 %v635, %v542
    %639 = vrot.lane.b32.xlu0 %v636, 64
    %v640 = vpop.permute.xlu0 %639
    %v642 = vmul.f32 %v635, %v640
    %644 = vrot.lane.b32.xlu0 %v642, 32
    %v645 = vpop.permute.xlu0 %644
    %v647 = vadd.f32 %v637, %v645
    %v648 = vtanh.pop %v647
    %650 = vrot.lane.b32.xlu0 %v648, 64
    %v651 = vpop.permute.xlu0 %650
    %v653 = vmul.f32 %v635, %v651
    %655 = vrot.lane.b32.xlu0 %v653, 32
    %v656 = vpop.permute.xlu0 %655
    %s658 = scalar_lea.vmem [#allocation4], 24
    %659 = vst.msk [vmem:[%s658] sm:$0xff] %vm127, %v656
    %s660 = scalar_lea.vmem [#allocation3], 32
    %v661 = vld [vmem:[%s660] sm:$0xff]
    %v662 = vsel %vm127, %v656, 0
    %664 = vmatprep.subr.mxu0 0.0
    %665 = vmatpush1.msra.mxu0 0.0
    %666 = vmatprep.subr.mxu0 0.0
    %667 = vmatpush1.msra.mxu0 0.0
    %668 = vmatprep.subr.mxu0 0.0
    %669 = vmatpush1.msra.mxu0 0.0
    %670 = vmatprep.subr.mxu0 0.0
    %671 = vmatpush1.msra.mxu0 0.0
    %672 = vmatprep.subr.mxu0 0.0
    %673 = vmatpush1.msra.mxu0 0.0
    %674 = vmatprep.subr.mxu0 0.0
    %675 = vmatpush1.msra.mxu0 0.0
    %676 = vmatprep.subr.mxu0 0.0
    %677 = vmatpush1.msra.mxu0 0.0
    %678 = vmatprep.subr.mxu0 0.0
    %679 = vmatpush1.msra.mxu0 0.0
    %680 = vmatprep.subr.mxu0 0.0
    %681 = vmatpush1.msra.mxu0 0.0
    %682 = vmatprep.subr.mxu0 0.0
    %683 = vmatpush1.msra.mxu0 0.0
    %684 = vmatprep.subr.mxu0 0.0
    %685 = vmatpush1.msra.mxu0 0.0
    %686 = vmatprep.subr.mxu0 0.0
    %687 = vmatpush1.msra.mxu0 0.0
    %688 = vmatprep.subr.mxu0 0.0
    %689 = vmatpush1.msra.mxu0 %v234
    %690 = vmatprep.subr.mxu0 0.0
    %691 = vmatpush1.msra.mxu0 %v233
    %692 = vmatprep.subr.mxu0 0.0
    %693 = vmatpush1.msra.mxu0 %v232
    %694 = vmatprep.subr.mxu0 0.0
    %695 = vmatpush1.msra.mxu0 %v231
    %696 = vmatprep.subr.mxu0 0.0
    %697 = vmatpush2.msra.mxu0 0.0
    %698 = vmatprep.subr.mxu0 0.0
    %699 = vmatpush2.msra.mxu0 0.0
    %700 = vmatprep.subr.mxu0 0.0
    %701 = vmatpush2.msra.mxu0 0.0
    %702 = vmatprep.subr.mxu0 0.0
    %703 = vmatpush2.msra.mxu0 0.0
    %704 = vmatprep.subr.mxu0 0.0
    %705 = vmatpush2.msra.mxu0 0.0
    %706 = vmatprep.subr.mxu0 0.0
    %707 = vmatpush2.msra.mxu0 0.0
    %708 = vmatprep.subr.mxu0 0.0
    %709 = vmatpush2.msra.mxu0 0.0
    %710 = vmatprep.subr.mxu0 0.0
    %711 = vmatpush2.msra.mxu0 0.0
    %712 = vmatprep.subr.mxu0 0.0
    %713 = vmatpush2.msra.mxu0 0.0
    %714 = vmatprep.subr.mxu0 0.0
    %715 = vmatpush2.msra.mxu0 0.0
    %716 = vmatprep.subr.mxu0 0.0
    %717 = vmatpush2.msra.mxu0 0.0
    %718 = vmatprep.subr.mxu0 0.0
    %719 = vmatpush2.msra.mxu0 0.0
    %720 = vmatprep.subr.mxu0 0.0
    %721 = vmatpush2.msra.mxu0 0.0
    %722 = vmatprep.subr.mxu0 0.0
    %723 = vmatpush2.msra.mxu0 0.0
    %724 = vmatprep.subr.mxu0 0.0
    %725 = vmatpush2.msra.mxu0 0.0
    %726 = vmatprep.subr.mxu0 0.0
    %727 = vmatpush2.msra.mxu0 0.0
    %728 = vmatprep.mubr.f32.mxu0 0.0
    %729 = vmatmul.mubr.f32.gmra.mxu0 %v662
    %v730 = vpop.f32.mrf.mxu0
    %v731 = vadd.f32 0.0, %v730
    %v732 = vpop.f32.mrf.mxu0
    %733 = vdwg.mxu0
    %v734 = vadd.f32 %v661, %v731
    %v735 = vxor.u32 %v734, 2147483648
    %v736 = vmul.f32 %v735, 1.442695
    %v737 = vpow.pop %v736
    %v738 = vadd.f32 %v737, 1.0
    %v739 = vrcp.pop %v738
    %v740 = vmul.f32 1.0, %v739
    %v741 = vtanh.pop %v734
    %v742 = vmul.f32 %v740, %v647
    %744 = vrot.lane.b32.xlu0 %v741, 64
    %v745 = vpop.permute.xlu0 %744
    %v747 = vmul.f32 %v740, %v745
    %749 = vrot.lane.b32.xlu0 %v747, 32
    %v750 = vpop.permute.xlu0 %749
    %v752 = vadd.f32 %v742, %v750
    %v753 = vtanh.pop %v752
    %755 = vrot.lane.b32.xlu0 %v753, 64
    %v756 = vpop.permute.xlu0 %755
    %v758 = vmul.f32 %v740, %v756
    %760 = vrot.lane.b32.xlu0 %v758, 32
    %v761 = vpop.permute.xlu0 %760
    %s763 = scalar_lea.vmem [#allocation4], 32
    %764 = vst.msk [vmem:[%s763] sm:$0xff] %vm127, %v761
    %s765 = scalar_lea.vmem [#allocation3], 40
    %v766 = vld [vmem:[%s765] sm:$0xff]
    %v767 = vsel %vm127, %v761, 0
    %769 = vmatprep.subr.mxu0 0.0
    %770 = vmatpush1.msra.mxu0 0.0
    %771 = vmatprep.subr.mxu0 0.0
    %772 = vmatpush1.msra.mxu0 0.0
    %773 = vmatprep.subr.mxu0 0.0
    %774 = vmatpush1.msra.mxu0 0.0
    %775 = vmatprep.subr.mxu0 0.0
    %776 = vmatpush1.msra.mxu0 0.0
    %777 = vmatprep.subr.mxu0 0.0
    %778 = vmatpush1.msra.mxu0 0.0
    %779 = vmatprep.subr.mxu0 0.0
    %780 = vmatpush1.msra.mxu0 0.0
    %781 = vmatprep.subr.mxu0 0.0
    %782 = vmatpush1.msra.mxu0 0.0
    %783 = vmatprep.subr.mxu0 0.0
    %784 = vmatpush1.msra.mxu0 0.0
    %785 = vmatprep.subr.mxu0 0.0
    %786 = vmatpush1.msra.mxu0 0.0
    %787 = vmatprep.subr.mxu0 0.0
    %788 = vmatpush1.msra.mxu0 0.0
    %789 = vmatprep.subr.mxu0 0.0
    %790 = vmatpush1.msra.mxu0 0.0
    %791 = vmatprep.subr.mxu0 0.0
    %792 = vmatpush1.msra.mxu0 0.0
    %793 = vmatprep.subr.mxu0 0.0
    %794 = vmatpush1.msra.mxu0 %v234
    %795 = vmatprep.subr.mxu0 0.0
    %796 = vmatpush1.msra.mxu0 %v233
    %797 = vmatprep.subr.mxu0 0.0
    %798 = vmatpush1.msra.mxu0 %v232
    %799 = vmatprep.subr.mxu0 0.0
    %800 = vmatpush1.msra.mxu0 %v231
    %801 = vmatprep.subr.mxu0 0.0
    %802 = vmatpush2.msra.mxu0 0.0
    %803 = vmatprep.subr.mxu0 0.0
    %804 = vmatpush2.msra.mxu0 0.0
    %805 = vmatprep.subr.mxu0 0.0
    %806 = vmatpush2.msra.mxu0 0.0
    %807 = vmatprep.subr.mxu0 0.0
    %808 = vmatpush2.msra.mxu0 0.0
    %809 = vmatprep.subr.mxu0 0.0
    %810 = vmatpush2.msra.mxu0 0.0
    %811 = vmatprep.subr.mxu0 0.0
    %812 = vmatpush2.msra.mxu0 0.0
    %813 = vmatprep.subr.mxu0 0.0
    %814 = vmatpush2.msra.mxu0 0.0
    %815 = vmatprep.subr.mxu0 0.0
    %816 = vmatpush2.msra.mxu0 0.0
    %817 = vmatprep.subr.mxu0 0.0
    %818 = vmatpush2.msra.mxu0 0.0
    %819 = vmatprep.subr.mxu0 0.0
    %820 = vmatpush2.msra.mxu0 0.0
    %821 = vmatprep.subr.mxu0 0.0
    %822 = vmatpush2.msra.mxu0 0.0
    %823 = vmatprep.subr.mxu0 0.0
    %824 = vmatpush2.msra.mxu0 0.0
    %825 = vmatprep.subr.mxu0 0.0
    %826 = vmatpush2.msra.mxu0 0.0
    %827 = vmatprep.subr.mxu0 0.0
    %828 = vmatpush2.msra.mxu0 0.0
    %829 = vmatprep.subr.mxu0 0.0
    %830 = vmatpush2.msra.mxu0 0.0
    %831 = vmatprep.subr.mxu0 0.0
    %832 = vmatpush2.msra.mxu0 0.0
    %833 = vmatprep.mubr.f32.mxu0 0.0
    %834 = vmatmul.mubr.f32.gmra.mxu0 %v767
    %v835 = vpop.f32.mrf.mxu0
    %v836 = vadd.f32 0.0, %v835
    %v837 = vpop.f32.mrf.mxu0
    %838 = vdwg.mxu0
    %v839 = vadd.f32 %v766, %v836
    %v840 = vxor.u32 %v839, 2147483648
    %v841 = vmul.f32 %v840, 1.442695
    %v842 = vpow.pop %v841
    %v843 = vadd.f32 %v842, 1.0
    %v844 = vrcp.pop %v843
    %v845 = vmul.f32 1.0, %v844
    %v846 = vtanh.pop %v839
    %v847 = vmul.f32 %v845, %v752
    %849 = vrot.lane.b32.xlu0 %v846, 64
    %v850 = vpop.permute.xlu0 %849
    %v852 = vmul.f32 %v845, %v850
    %854 = vrot.lane.b32.xlu0 %v852, 32
    %v855 = vpop.permute.xlu0 %854
    %v857 = vadd.f32 %v847, %v855
    %v858 = vtanh.pop %v857
    %860 = vrot.lane.b32.xlu0 %v858, 64
    %v861 = vpop.permute.xlu0 %860
    %v863 = vmul.f32 %v845, %v861
    %865 = vrot.lane.b32.xlu0 %v863, 32
    %v866 = vpop.permute.xlu0 %865
    %s868 = scalar_lea.vmem [#allocation4], 40
    %869 = vst.msk [vmem:[%s868] sm:$0xff] %vm127, %v866
    %s870 = scalar_lea.vmem [#allocation3], 48
    %v871 = vld [vmem:[%s870] sm:$0xff]
    %v872 = vsel %vm127, %v866, 0
    %874 = vmatprep.subr.mxu0 0.0
    %875 = vmatpush1.msra.mxu0 0.0
    %876 = vmatprep.subr.mxu0 0.0
    %877 = vmatpush1.msra.mxu0 0.0
    %878 = vmatprep.subr.mxu0 0.0
    %879 = vmatpush1.msra.mxu0 0.0
    %880 = vmatprep.subr.mxu0 0.0
    %881 = vmatpush1.msra.mxu0 0.0
    %882 = vmatprep.subr.mxu0 0.0
    %883 = vmatpush1.msra.mxu0 0.0
    %884 = vmatprep.subr.mxu0 0.0
    %885 = vmatpush1.msra.mxu0 0.0
    %886 = vmatprep.subr.mxu0 0.0
    %887 = vmatpush1.msra.mxu0 0.0
    %888 = vmatprep.subr.mxu0 0.0
    %889 = vmatpush1.msra.mxu0 0.0
    %890 = vmatprep.subr.mxu0 0.0
    %891 = vmatpush1.msra.mxu0 0.0
    %892 = vmatprep.subr.mxu0 0.0
    %893 = vmatpush1.msra.mxu0 0.0
    %894 = vmatprep.subr.mxu0 0.0
    %895 = vmatpush1.msra.mxu0 0.0
    %896 = vmatprep.subr.mxu0 0.0
    %897 = vmatpush1.msra.mxu0 0.0
    %898 = vmatprep.subr.mxu0 0.0
    %899 = vmatpush1.msra.mxu0 %v234
    %900 = vmatprep.subr.mxu0 0.0
    %901 = vmatpush1.msra.mxu0 %v233
    %902 = vmatprep.subr.mxu0 0.0
    %903 = vmatpush1.msra.mxu0 %v232
    %904 = vmatprep.subr.mxu0 0.0
    %905 = vmatpush1.msra.mxu0 %v231
    %906 = vmatprep.subr.mxu0 0.0
    %907 = vmatpush2.msra.mxu0 0.0
    %908 = vmatprep.subr.mxu0 0.0
    %909 = vmatpush2.msra.mxu0 0.0
    %910 = vmatprep.subr.mxu0 0.0
    %911 = vmatpush2.msra.mxu0 0.0
    %912 = vmatprep.subr.mxu0 0.0
    %913 = vmatpush2.msra.mxu0 0.0
    %914 = vmatprep.subr.mxu0 0.0
    %915 = vmatpush2.msra.mxu0 0.0
    %916 = vmatprep.subr.mxu0 0.0
    %917 = vmatpush2.msra.mxu0 0.0
    %918 = vmatprep.subr.mxu0 0.0
    %919 = vmatpush2.msra.mxu0 0.0
    %920 = vmatprep.subr.mxu0 0.0
    %921 = vmatpush2.msra.mxu0 0.0
    %922 = vmatprep.subr.mxu0 0.0
    %923 = vmatpush2.msra.mxu0 0.0
    %924 = vmatprep.subr.mxu0 0.0
    %925 = vmatpush2.msra.mxu0 0.0
    %926 = vmatprep.subr.mxu0 0.0
    %927 = vmatpush2.msra.mxu0 0.0
    %928 = vmatprep.subr.mxu0 0.0
    %929 = vmatpush2.msra.mxu0 0.0
    %930 = vmatprep.subr.mxu0 0.0
    %931 = vmatpush2.msra.mxu0 0.0
    %932 = vmatprep.subr.mxu0 0.0
    %933 = vmatpush2.msra.mxu0 0.0
    %934 = vmatprep.subr.mxu0 0.0
    %935 = vmatpush2.msra.mxu0 0.0
    %936 = vmatprep.subr.mxu0 0.0
    %937 = vmatpush2.msra.mxu0 0.0
    %938 = vmatprep.mubr.f32.mxu0 0.0
    %939 = vmatmul.mubr.f32.gmra.mxu0 %v872
    %v940 = vpop.f32.mrf.mxu0
    %v941 = vadd.f32 0.0, %v940
    %v942 = vpop.f32.mrf.mxu0
    %943 = vdwg.mxu0
    %v944 = vadd.f32 %v871, %v941
    %v945 = vxor.u32 %v944, 2147483648
    %v946 = vmul.f32 %v945, 1.442695
    %v947 = vpow.pop %v946
    %v948 = vadd.f32 %v947, 1.0
    %v949 = vrcp.pop %v948
    %v950 = vmul.f32 1.0, %v949
    %v951 = vtanh.pop %v944
    %v952 = vmul.f32 %v950, %v857
    %954 = vrot.lane.b32.xlu0 %v951, 64
    %v955 = vpop.permute.xlu0 %954
    %v957 = vmul.f32 %v950, %v955
    %959 = vrot.lane.b32.xlu0 %v957, 32
    %v960 = vpop.permute.xlu0 %959
    %v962 = vadd.f32 %v952, %v960
    %v963 = vtanh.pop %v962
    %965 = vrot.lane.b32.xlu0 %v963, 64
    %v966 = vpop.permute.xlu0 %965
    %v968 = vmul.f32 %v950, %v966
    %970 = vrot.lane.b32.xlu0 %v968, 32
    %v971 = vpop.permute.xlu0 %970
    %s973 = scalar_lea.vmem [#allocation4], 48
    %974 = vst.msk [vmem:[%s973] sm:$0xff] %vm127, %v971
    %s975 = scalar_lea.vmem [#allocation3], 56
    %v976 = vld [vmem:[%s975] sm:$0xff]
    %v977 = vsel %vm127, %v971, 0
    %979 = vmatprep.subr.mxu0 0.0
    %980 = vmatpush1.msra.mxu0 0.0
    %981 = vmatprep.subr.mxu0 0.0
    %982 = vmatpush1.msra.mxu0 0.0
    %983 = vmatprep.subr.mxu0 0.0
    %984 = vmatpush1.msra.mxu0 0.0
    %985 = vmatprep.subr.mxu0 0.0
    %986 = vmatpush1.msra.mxu0 0.0
    %987 = vmatprep.subr.mxu0 0.0
    %988 = vmatpush1.msra.mxu0 0.0
    %989 = vmatprep.subr.mxu0 0.0
    %990 = vmatpush1.msra.mxu0 0.0
    %991 = vmatprep.subr.mxu0 0.0
    %992 = vmatpush1.msra.mxu0 0.0
    %993 = vmatprep.subr.mxu0 0.0
    %994 = vmatpush1.msra.mxu0 0.0
    %995 = vmatprep.subr.mxu0 0.0
    %996 = vmatpush1.msra.mxu0 0.0
    %997 = vmatprep.subr.mxu0 0.0
    %998 = vmatpush1.msra.mxu0 0.0
    %999 = vmatprep.subr.mxu0 0.0
    %1000 = vmatpush1.msra.mxu0 0.0
    %1001 = vmatprep.subr.mxu0 0.0
    %1002 = vmatpush1.msra.mxu0 0.0
    %1003 = vmatprep.subr.mxu0 0.0
    %1004 = vmatpush1.msra.mxu0 %v234
    %1005 = vmatprep.subr.mxu0 0.0
    %1006 = vmatpush1.msra.mxu0 %v233
    %1007 = vmatprep.subr.mxu0 0.0
    %1008 = vmatpush1.msra.mxu0 %v232
    %1009 = vmatprep.subr.mxu0 0.0
    %1010 = vmatpush1.msra.mxu0 %v231
    %1011 = vmatprep.subr.mxu0 0.0
    %1012 = vmatpush2.msra.mxu0 0.0
    %1013 = vmatprep.subr.mxu0 0.0
    %1014 = vmatpush2.msra.mxu0 0.0
    %1015 = vmatprep.subr.mxu0 0.0
    %1016 = vmatpush2.msra.mxu0 0.0
    %1017 = vmatprep.subr.mxu0 0.0
    %1018 = vmatpush2.msra.mxu0 0.0
    %1019 = vmatprep.subr.mxu0 0.0
    %1020 = vmatpush2.msra.mxu0 0.0
    %1021 = vmatprep.subr.mxu0 0.0
    %1022 = vmatpush2.msra.mxu0 0.0
    %1023 = vmatprep.subr.mxu0 0.0
    %1024 = vmatpush2.msra.mxu0 0.0
    %1025 = vmatprep.subr.mxu0 0.0
    %1026 = vmatpush2.msra.mxu0 0.0
    %1027 = vmatprep.subr.mxu0 0.0
    %1028 = vmatpush2.msra.mxu0 0.0
    %1029 = vmatprep.subr.mxu0 0.0
    %1030 = vmatpush2.msra.mxu0 0.0
    %1031 = vmatprep.subr.mxu0 0.0
    %1032 = vmatpush2.msra.mxu0 0.0
    %1033 = vmatprep.subr.mxu0 0.0
    %1034 = vmatpush2.msra.mxu0 0.0
    %1035 = vmatprep.subr.mxu0 0.0
    %1036 = vmatpush2.msra.mxu0 0.0
    %1037 = vmatprep.subr.mxu0 0.0
    %1038 = vmatpush2.msra.mxu0 0.0
    %1039 = vmatprep.subr.mxu0 0.0
    %1040 = vmatpush2.msra.mxu0 0.0
    %1041 = vmatprep.subr.mxu0 0.0
    %1042 = vmatpush2.msra.mxu0 0.0
    %1043 = vmatprep.mubr.f32.mxu0 0.0
    %1044 = vmatmul.mubr.f32.gmra.mxu0 %v977
    %v1045 = vpop.f32.mrf.mxu0
    %v1046 = vadd.f32 0.0, %v1045
    %v1047 = vpop.f32.mrf.mxu0
    %1048 = vdwg.mxu0
    %v1049 = vadd.f32 %v976, %v1046
    %v1050 = vxor.u32 %v1049, 2147483648
    %v1051 = vmul.f32 %v1050, 1.442695
    %v1052 = vpow.pop %v1051
    %v1053 = vadd.f32 %v1052, 1.0
    %v1054 = vrcp.pop %v1053
    %v1055 = vmul.f32 1.0, %v1054
    %v1056 = vtanh.pop %v1049
    %v1057 = vmul.f32 %v1055, %v962
    %1059 = vrot.lane.b32.xlu0 %v1056, 64
    %v1060 = vpop.permute.xlu0 %1059
    %v1062 = vmul.f32 %v1055, %v1060
    %1064 = vrot.lane.b32.xlu0 %v1062, 32
    %v1065 = vpop.permute.xlu0 %1064
    %v1067 = vadd.f32 %v1057, %v1065
    %v1068 = vtanh.pop %v1067
    %1070 = vrot.lane.b32.xlu0 %v1068, 64
    %v1071 = vpop.permute.xlu0 %1070
    %v1073 = vmul.f32 %v1055, %v1071
    %1075 = vrot.lane.b32.xlu0 %v1073, 32
    %v1076 = vpop.permute.xlu0 %1075
    %s1078 = scalar_lea.vmem [#allocation4], 56
    %1079 = vst.msk [vmem:[%s1078] sm:$0xff] %vm127, %v1076
    %v1080 = vld [vmem:[#allocation4] sm:$0xff]
    %v1081 = vld [vmem:[#allocation4 + $0x8] sm:$0xff]
    %v1082 = vld [vmem:[#allocation4 + $0x10] sm:$0xff]
    %v1083 = vld [vmem:[#allocation4 + $0x18] sm:$0xff]
    %v1084 = vld [vmem:[#allocation4 + $0x20] sm:$0xff]
    %v1085 = vld [vmem:[#allocation4 + $0x28] sm:$0xff]
    %v1086 = vld [vmem:[#allocation4 + $0x30] sm:$0xff]
    %v1087 = vld [vmem:[#allocation4 + $0x38] sm:$0xff]
    %v1088 = vld [vmem:[#allocation16] sm:$0xff]
    %v1089 = vld [vmem:[#allocation16 + $0x8] sm:$0xff]
    %v1090 = vld [vmem:[#allocation16 + $0x10] sm:$0xff]
    %v1091 = vld [vmem:[#allocation16 + $0x18] sm:$0xff]
    %v1092 = vld [vmem:[%s8] sm:$0x1]
    %v1094 = vlaneseq
    %v1095 = vshrl.u32 %v1094, 7
    %v1096 = vsub.s32 0, %v1095
    %v1097 = vrot.slane %v1092, %v1096
    %v1100 = vsel %vm127, %v1080, 0
    %v1103 = vsel %vm127, %v1081, 0
    %v1106 = vsel %vm127, %v1082, 0
    %v1109 = vsel %vm127, %v1083, 0
    %v1112 = vsel %vm127, %v1084, 0
    %v1115 = vsel %vm127, %v1085, 0
    %v1118 = vsel %vm127, %v1086, 0
    %v1121 = vsel %vm127, %v1087, 0
    %1123 = vmatprep.subr.mxu0 0.0
    %1124 = vmatpush1.msra.mxu0 0.0
    %1125 = vmatprep.subr.mxu0 0.0
    %1126 = vmatpush1.msra.mxu0 0.0
    %1127 = vmatprep.subr.mxu0 0.0
    %1128 = vmatpush1.msra.mxu0 0.0
    %1129 = vmatprep.subr.mxu0 0.0
    %1130 = vmatpush1.msra.mxu0 0.0
    %1131 = vmatprep.subr.mxu0 0.0
    %1132 = vmatpush1.msra.mxu0 0.0
    %1133 = vmatprep.subr.mxu0 0.0
    %1134 = vmatpush1.msra.mxu0 0.0
    %1135 = vmatprep.subr.mxu0 0.0
    %1136 = vmatpush1.msra.mxu0 0.0
    %1137 = vmatprep.subr.mxu0 0.0
    %1138 = vmatpush1.msra.mxu0 0.0
    %1139 = vmatprep.subr.mxu0 0.0
    %1140 = vmatpush1.msra.mxu0 0.0
    %1141 = vmatprep.subr.mxu0 0.0
    %1142 = vmatpush1.msra.mxu0 0.0
    %1143 = vmatprep.subr.mxu0 0.0
    %1144 = vmatpush1.msra.mxu0 0.0
    %1145 = vmatprep.subr.mxu0 0.0
    %1146 = vmatpush1.msra.mxu0 0.0
    %1147 = vmatprep.subr.mxu0 0.0
    %1148 = vmatpush1.msra.mxu0 %v1091
    %1149 = vmatprep.subr.mxu0 0.0
    %1150 = vmatpush1.msra.mxu0 %v1090
    %1151 = vmatprep.subr.mxu0 0.0
    %1152 = vmatpush1.msra.mxu0 %v1089
    %1153 = vmatprep.subr.mxu0 0.0
    %1154 = vmatpush1.msra.mxu0 %v1088
    %1155 = vmatprep.subr.mxu0 0.0
    %1156 = vmatpush2.msra.mxu0 0.0
    %1157 = vmatprep.subr.mxu0 0.0
    %1158 = vmatpush2.msra.mxu0 0.0
    %1159 = vmatprep.subr.mxu0 0.0
    %1160 = vmatpush2.msra.mxu0 0.0
    %1161 = vmatprep.subr.mxu0 0.0
    %1162 = vmatpush2.msra.mxu0 0.0
    %1163 = vmatprep.subr.mxu0 0.0
    %1164 = vmatpush2.msra.mxu0 0.0
    %1165 = vmatprep.subr.mxu0 0.0
    %1166 = vmatpush2.msra.mxu0 0.0
    %1167 = vmatprep.subr.mxu0 0.0
    %1168 = vmatpush2.msra.mxu0 0.0
    %1169 = vmatprep.subr.mxu0 0.0
    %1170 = vmatpush2.msra.mxu0 0.0
    %1171 = vmatprep.subr.mxu0 0.0
    %1172 = vmatpush2.msra.mxu0 0.0
    %1173 = vmatprep.subr.mxu0 0.0
    %1174 = vmatpush2.msra.mxu0 0.0
    %1175 = vmatprep.subr.mxu0 0.0
    %1176 = vmatpush2.msra.mxu0 0.0
    %1177 = vmatprep.subr.mxu0 0.0
    %1178 = vmatpush2.msra.mxu0 0.0
    %1179 = vmatprep.subr.mxu0 0.0
    %1180 = vmatpush2.msra.mxu0 0.0
    %1181 = vmatprep.subr.mxu0 0.0
    %1182 = vmatpush2.msra.mxu0 0.0
    %1183 = vmatprep.subr.mxu0 0.0
    %1184 = vmatpush2.msra.mxu0 0.0
    %1185 = vmatprep.subr.mxu0 0.0
    %1186 = vmatpush2.msra.mxu0 0.0
    %1187 = vmatprep.mubr.f32.mxu0 0.0
    %1188 = vmatmul.mubr.f32.gmra.mxu0 %v1100
    %v1189 = vpop.f32.mrf.mxu0
    %v1190 = vadd.f32 %v1097, %v1189
    %v1191 = vpop.f32.mrf.mxu0
    %1192 = vmatprep.mubr.f32.mxu0 0.0
    %1193 = vmatmul.mubr.f32.gmra.mxu0 %v1103
    %v1194 = vpop.f32.mrf.mxu0
    %v1195 = vadd.f32 %v1097, %v1194
    %v1196 = vpop.f32.mrf.mxu0
    %1197 = vmatprep.mubr.f32.mxu0 0.0
    %1198 = vmatmul.mubr.f32.gmra.mxu0 %v1106
    %v1199 = vpop.f32.mrf.mxu0
    %v1200 = vadd.f32 %v1097, %v1199
    %v1201 = vpop.f32.mrf.mxu0
    %1202 = vmatprep.mubr.f32.mxu0 0.0
    %1203 = vmatmul.mubr.f32.gmra.mxu0 %v1109
    %v1204 = vpop.f32.mrf.mxu0
    %v1205 = vadd.f32 %v1097, %v1204
    %v1206 = vpop.f32.mrf.mxu0
    %1207 = vmatprep.mubr.f32.mxu0 0.0
    %1208 = vmatmul.mubr.f32.gmra.mxu0 %v1112
    %v1209 = vpop.f32.mrf.mxu0
    %v1210 = vadd.f32 %v1097, %v1209
    %v1211 = vpop.f32.mrf.mxu0
    %1212 = vmatprep.mubr.f32.mxu0 0.0
    %1213 = vmatmul.mubr.f32.gmra.mxu0 %v1115
    %v1214 = vpop.f32.mrf.mxu0
    %v1215 = vadd.f32 %v1097, %v1214
    %v1216 = vpop.f32.mrf.mxu0
    %1217 = vmatprep.mubr.f32.mxu0 0.0
    %1218 = vmatmul.mubr.f32.gmra.mxu0 %v1118
    %v1219 = vpop.f32.mrf.mxu0
    %v1220 = vadd.f32 %v1097, %v1219
    %v1221 = vpop.f32.mrf.mxu0
    %1222 = vmatprep.mubr.f32.mxu0 0.0
    %1223 = vmatmul.mubr.f32.gmra.mxu0 %v1121
    %v1224 = vpop.f32.mrf.mxu0
    %v1225 = vadd.f32 %v1097, %v1224
    %v1226 = vpop.f32.mrf.mxu0
    %1227 = vdwg.mxu0
    %1228 = vst [vmem:[#allocation18] sm:$0xff] %v1190
    %1229 = vst [vmem:[#allocation18 + $0x8] sm:$0xff] %v1195
    %1230 = vst [vmem:[#allocation18 + $0x10] sm:$0xff] %v1200
    %1231 = vst [vmem:[#allocation18 + $0x18] sm:$0xff] %v1205
    %1232 = vst [vmem:[#allocation18 + $0x20] sm:$0xff] %v1210
    %1233 = vst [vmem:[#allocation18 + $0x28] sm:$0xff] %v1215
    %1234 = vst [vmem:[#allocation18 + $0x30] sm:$0xff] %v1220
    %1235 = vst [vmem:[#allocation18 + $0x38] sm:$0xff] %v1225
    // Predicated region
    $region65: #{tpu_custom_call.1} parent=1 // pred_check
      _
    $region66: #{tpu_custom_call.1} parent=1 // pred_check_branch
      %1237 = sbr.rel (0) target = $region68
    $region67: #{tpu_custom_call.1} parent=1 // pred_region
      %s1239 = ssub.s32 1024, 1024
      %1240 = vsyncadd [#allocation9], %s1239
      %s1241 = sshll.u32 [#allocation18], 4
      %s1242 = int_to_ptr.vmem [resolvable:$true] %s1241
      %1247 = dma.vmem_to_hbm [thread:$0]  %s1242, 1024, %s9, [#allocation9], 128, 128, 8
    $region68: #{tpu_custom_call.1} parent=1 // pred_fallthru
      _
    // Predicated region
    $region69: #{tpu_custom_call.1} parent=1 // pred_check
      _
    $region70: #{tpu_custom_call.1} parent=1 // pred_check_branch
      %1249 = sbr.rel (0) target = $region72
    $region71: #{tpu_custom_call.1} parent=1 // pred_region
      %1250 = dma.done [#allocation9], 1024
    $region72: #{tpu_custom_call.1} parent=1 // pred_fallthru
      _
    %1251 = vsyncpa [#allocation8], 1
    %1252 = vsyncpa [#allocation11], 1
    %1253 = vsyncpa [#allocation14], 1
    %1254 = vsyncpa [#allocation17], 1
    %1255 = vsyncpa [#allocation9], 1

</llo_original>
